<compile_context>
chip_gen: v6e
topology: v6e:2x2x1
jax: 0.10.0
libtpu: 0.0.40
codegen_flags: <defaults>
</compile_context>

<pallas_src>
import functools
import math

import jax
import jax.numpy as jnp
from jax.experimental import pallas as pl
from jax.experimental.pallas import tpu as pltpu


# ----------------------------- helpers --------------------------------------
def _silu(x):
    return x * jax.nn.sigmoid(x)


def _softplus(x):
    # matches torch.nn.functional.softplus (threshold=20)
    return jnp.where(x > 20.0, x, jnp.log1p(jnp.exp(jnp.minimum(x, 20.0))))


def _block_diag(mat, n):
    r, c = mat.shape
    out = jnp.zeros((n * r, n * c), mat.dtype)
    for i in range(n):
        out = out.at[i * r:(i + 1) * r, i * c:(i + 1) * c].set(mat)
    return out


# ----------------------------- Pallas kernel --------------------------------
def fc_decoder_kernel(hs_ref,
                      w_in_ref, conv_w_ref, conv_b_ref,
                      w_xp_ref, b_dt_ref,
                      neg_a_ref, d_param_ref,
                      w_ow1_ref, b1_ref, w2_ref, b2_ref, w3_ref, b3_ref,
                      out_ref, *, L):
    tb = hs_ref.shape[0]
    d_conv, d_inner = conv_w_ref.shape
    half = neg_a_ref.shape[0]               # d_state // 2 (lane-packed pairs)
    d_state = 2 * half
    xp_cols = w_xp_ref.shape[1] // L        # per-timestep x_proj slab (128-pad)

    w_in = w_in_ref[...]                    # (L*D, L*2*d_inner)  block-diag [x|z]
    conv_w = conv_w_ref[...]                # (d_conv, d_inner)
    conv_b = conv_b_ref[...]                # (1, d_inner)
    w_xp = w_xp_ref[...]                    # (L*d_inner, L*xp_cols) block-diag [dt|B|C|pad]
    b_dt = b_dt_ref[...]                    # (1, d_inner)
    neg_a_p = neg_a_ref[...]                # (d_state/2, 2*d_inner)  lane-packed -exp(A_log).T
    d_param = d_param_ref[...]              # (1, d_inner)

    # ---- in_proj for ALL timesteps: one (tb, L*D) x (L*D, L*2*d_inner) dot --
    xz = jnp.dot(hs_ref[...].astype(w_in.dtype), w_in,
                 preferred_element_type=jnp.float32)                    # (tb, L*2*di)
    x_list = [xz[:, l * 2 * d_inner: l * 2 * d_inner + d_inner] for l in range(L)]
    z_list = [xz[:, l * 2 * d_inner + d_inner:(l + 1) * 2 * d_inner] for l in range(L)]

    # ---- causal depthwise conv1d + SiLU (accumulator starts at first tap) ---
    cw = [conv_w[j:j + 1, :] for j in range(d_conv)]
    u_list = []
    for l in range(L):
        t0 = max(0, l - (d_conv - 1))
        acc = x_list[t0] * cw[d_conv - 1 - (l - t0)]
        for t in range(t0 + 1, l + 1):
            acc = acc + x_list[t] * cw[d_conv - 1 - (l - t)]
        u_list.append(_silu(acc + conv_b))                               # (tb, di)

    # ---- x_proj for ALL timesteps: one (tb, L*di) x (L*di, L*128) dot -------
    u_cat = jnp.concatenate(u_list, axis=-1)                             # (tb, L*di)
    proj = jnp.dot(u_cat.astype(w_xp.dtype), w_xp,
                   preferred_element_type=jnp.float32)                   # (tb, L*xp_cols)

    # ---- selective scan: lane-packed state (tb, d_state/2, 2*d_inner) -------
    # packed row s holds d_state index s in lanes [0:di) and s+half in [di:2di)
    y_parts = []
    h = jnp.zeros((tb, half, 2 * d_inner), jnp.float32)
    for l in range(L):
        base = l * xp_cols
        u = u_list[l]
        dt = _softplus(proj[:, base:base + d_inner] + b_dt)              # (tb, di)
        bm = proj[:, base + d_inner:base + d_inner + d_state]            # (tb, ds)
        cm = proj[:, base + d_inner + d_state:base + d_inner + 2 * d_state]

        dt2 = jnp.concatenate([dt, dt], axis=-1)                         # (tb, 2di)
        dtu = dt * u
        dtu2 = jnp.concatenate([dtu, dtu], axis=-1)                      # (tb, 2di)
        bm_p = jnp.concatenate(
            [jnp.broadcast_to(bm[:, :half, None], (tb, half, d_inner)),
             jnp.broadcast_to(bm[:, half:, None], (tb, half, d_inner))], axis=-1)
        cm_p = jnp.concatenate(
            [jnp.broadcast_to(cm[:, :half, None], (tb, half, d_inner)),
             jnp.broadcast_to(cm[:, half:, None], (tb, half, d_inner))], axis=-1)

        dA = jnp.exp(dt2[:, None, :] * neg_a_p[None, :, :])              # (tb, half, 2di)
        h = dA * h + dtu2[:, None, :] * bm_p
        ys = jnp.sum(h * cm_p, axis=1)                                   # (tb, 2di)
        y = ys[:, :d_inner] + ys[:, d_inner:] + d_param * u              # (tb, di)
        y_parts.append(y * _silu(z_list[l]))

    # ---- out_proj fused into head layer 1; single dot per head layer --------
    y_cat = jnp.concatenate(y_parts, axis=-1)                            # (tb, L*di)
    w_ow1 = w_ow1_ref[...]
    h1 = jnp.maximum(
        jnp.dot(y_cat.astype(w_ow1.dtype), w_ow1,
                preferred_element_type=jnp.float32) + b1_ref[...], 0.0)
    w2 = w2_ref[...]
    h2 = jax.nn.sigmoid(
        jnp.dot(h1.astype(w2.dtype), w2,
                preferred_element_type=jnp.float32) + b2_ref[...])
    w3 = w3_ref[...]
    out_ref[...] = jnp.dot(h2.astype(w3.dtype), w3,
                           preferred_element_type=jnp.float32) + b3_ref[...]


# ----------------------------- wrapper ---------------------------------------
def fc_decoder_forward(hs_lbd, params, *, block_b=None, matmul_dtype=jnp.bfloat16):
    """hs_lbd: (L, B, D) like the torch `hs` before `.permute(1, 0, 2)`."""
    hs = hs_lbd.astype(jnp.float32)
    L, B, D = hs.shape
    d_inner = params["w_in_x"].shape[1]
    d_state = params["a_log"].shape[1]
    num_class = params["w3"].shape[1]
    hi = jax.lax.Precision.HIGHEST
    mdt = matmul_dtype
    if d_state % 2 != 0:
        raise ValueError("d_state must be even for the lane-packed scan")

    # torch: hs.permute(1, 0, 2) ... flatten(1)  -> present hs as (B, L*D)
    hs_bld = jnp.transpose(hs, (1, 0, 2)).reshape(B, L * D)

    # --- weight-only precompute (free under jit) ---
    w_in = jnp.concatenate([params["w_in_x"], params["w_in_z"]], axis=1)          # (D, 2di)
    w_in_bd = _block_diag(w_in, L).astype(mdt)                                    # (L*D, L*2di)

    xp_cols = ((d_inner + 2 * d_state + 127) // 128) * 128                        # lane-dense slab
    w_xp = jnp.concatenate(
        [jnp.dot(params["w_x_dt"], params["w_dt"], precision=hi),
         params["w_x_b"], params["w_x_c"]], axis=1)                               # (di, di+2ds)
    w_xp = jnp.pad(w_xp, ((0, 0), (0, xp_cols - (d_inner + 2 * d_state))))
    w_xp_bd = _block_diag(w_xp, L).astype(mdt)                                    # (L*di, L*xp_cols)

    neg_a_t = (-jnp.exp(params["a_log"])).T                                       # (ds, di)
    half = d_state // 2
    neg_a_p = jnp.concatenate([neg_a_t[:half], neg_a_t[half:]], axis=-1)          # (ds/2, 2di)

    w_ow1 = jnp.concatenate(
        [jnp.dot(params["w_out"], params["w1"][l * D:(l + 1) * D, :], precision=hi)
         for l in range(L)], axis=0).astype(mdt)                                  # (L*di, hid1)

    nc_pad = ((num_class + 127) // 128) * 128                                     # lane-dense store
    w3p = jnp.pad(params["w3"], ((0, 0), (0, nc_pad - num_class))).astype(mdt)
    b3p = jnp.pad(params["b3"], ((0, 0), (0, nc_pad - num_class)))

    # batch is a "parallel" grid axis; block_b multiple of 8 fills sublanes and
    # (with grid >= 2) shards across both v7x TensorCores.
    tb = B if block_b is None else block_b
    if B % tb != 0:
        raise ValueError(f"batch {B} must be a multiple of block_b {tb}")
    if tb != B and tb % 8 != 0:
        raise ValueError("block_b must be a multiple of 8 (or the full batch)")

    args = (hs_bld, w_in_bd, params["conv_w"], params["conv_b"],
            w_xp_bd, params["b_dt"], neg_a_p, params["d_param"],
            w_ow1, params["b1"], params["w2"].astype(mdt), params["b2"], w3p, b3p)

    def rep_spec(a):                                   # replicated weight spec
        return pl.BlockSpec(a.shape, lambda i, z=(0,) * a.ndim: z)

    in_specs = ([pl.BlockSpec((tb, L * D), lambda i: (i, 0))]
                + [rep_spec(a) for a in args[1:]])

    out = pl.pallas_call(
        functools.partial(fc_decoder_kernel, L=L),
        out_shape=jax.ShapeDtypeStruct((B, nc_pad), jnp.float32),
        grid=(B // tb,),
        in_specs=in_specs,
        out_specs=pl.BlockSpec((tb, nc_pad), lambda i: (i, 0)),
        compiler_params=pltpu.CompilerParams(dimension_semantics=("parallel",)),
    )(*args)
    return out[:, :num_class]


# ----------------------------- plain-JAX glue --------------------------------
def pre_model_transformer(src, p):
    # TODO(synk): stand-in for the external injected pre-model (linear AE stub).
    h = jnp.tanh(src @ p["enc_t"])                # (B, D)
    rec = (h @ p["dec_t"],)
    return rec, h[None, :, :]                     # hs: (1, B, D)


def pre_model_mamba(src, p):
    # TODO(synk): stand-in for the external injected pre-model (linear AE stub).
    h = jnp.tanh(src @ p["enc_m"])
    rec = (h @ p["dec_m"],)
    return rec, h[None, :, :]


def predictor_forward(src, p):
    rec_t, hs_t = pre_model_transformer(src, p)
    rec_m, hs_m = pre_model_mamba(src, p)
    rec = list(rec_t) + list(rec_m)
    hs = jnp.concatenate([hs_t, hs_m], axis=0)    # (input_num, B, D)
    out = fc_decoder_forward(hs, p)
    return rec, out


# ----------------------------- pure-JAX reference ----------------------------
def fc_decoder_ref(hs_lbd, p):
    hs = jnp.transpose(hs_lbd, (1, 0, 2)).astype(jnp.float32)
    B, L, D = hs.shape
    d_inner = p["w_in_x"].shape[1]
    d_state = p["a_log"].shape[1]
    d_conv = p["conv_w"].shape[0]
    x = hs @ p["w_in_x"]
    z = hs @ p["w_in_z"]
    xpad = jnp.pad(x, ((0, 0), (d_conv - 1, 0), (0, 0)))
    xc = jnp.stack(
        [(xpad[:, l:l + d_conv, :] * p["conv_w"][None]).sum(1) for l in range(L)],
        axis=1) + p["conv_b"][None]
    xc = xc * jax.nn.sigmoid(xc)
    A = -jnp.exp(p["a_log"])
    h = jnp.zeros((B, d_inner, d_state), jnp.float32)
    ys = []
    for l in range(L):
        u = xc[:, l]
        dt = _softplus(u @ p["w_x_dt"] @ p["w_dt"] + p["b_dt"])
        Bm = u @ p["w_x_b"]
        Cm = u @ p["w_x_c"]
        h = jnp.exp(dt[:, :, None] * A[None]) * h + (dt * u)[:, :, None] * Bm[:, None, :]
        y = (h * Cm[:, None, :]).sum(-1) + p["d_param"] * u
        y = y * (z[:, l] * jax.nn.sigmoid(z[:, l]))
        ys.append(y @ p["w_out"])
    yf = jnp.concatenate(ys, -1)
    h1 = jnp.maximum(yf @ p["w1"] + p["b1"], 0.0)
    h2 = jax.nn.sigmoid(h1 @ p["w2"] + p["b2"])
    return h2 @ p["w3"] + p["b3"]


# ----------------------------- parameter init --------------------------------
def make_params(key, num_class, D, input_num, feat):
    d_state, d_conv, expand = 16, 4, 2
    d_inner = expand * D
    dt_rank = math.ceil(D / 16)
    n_half = int(input_num / 2)
    ks = jax.random.split(key, 24)

    def rnd(k, shape, scale=0.05):
        return (scale * jax.random.normal(k, shape)).astype(jnp.float32)

    p = {
        # pre-model stand-ins
        "enc_t": rnd(ks[0], (feat, D)), "dec_t": rnd(ks[1], (D, feat)),
        "enc_m": rnd(ks[2], (feat, D)), "dec_m": rnd(ks[3], (D, feat)),
        # Mamba fusion_atten (d_model=D, d_state=16, d_conv=4, expand=2)
        "w_in_x": rnd(ks[4], (D, d_inner)),
        "w_in_z": rnd(ks[5], (D, d_inner)),
        "conv_w": rnd(ks[6], (d_conv, d_inner)),
        "conv_b": rnd(ks[7], (1, d_inner)),
        "w_x_dt": rnd(ks[8], (d_inner, dt_rank)),
        "w_x_b": rnd(ks[9], (d_inner, d_state)),
        "w_x_c": rnd(ks[10], (d_inner, d_state)),
        "w_dt": rnd(ks[11], (dt_rank, d_inner), scale=0.5),
        "b_dt": rnd(ks[12], (1, d_inner), scale=0.5),
        "a_log": jnp.log(jnp.broadcast_to(
            jnp.arange(1, d_state + 1, dtype=jnp.float32)[None, :], (d_inner, d_state))),
        "d_param": jnp.ones((1, d_inner), jnp.float32),
        "w_out": rnd(ks[13], (d_inner, D)),
        # FC head
        "w1": rnd(ks[14], (D * input_num, D * n_half)),
        "b1": rnd(ks[15], (1, D * n_half)),
        "w2": rnd(ks[16], (D * n_half, D // n_half)),
        "b2": rnd(ks[17], (1, D // n_half)),
        "w3": rnd(ks[18], (D // n_half, num_class)),
        "b3": rnd(ks[19], (1, num_class)),
    }
    return p


# ----------------------------- main ------------------------------------------
if __name__ == "__main__":
    B, FEAT, D, NUM_CLASS, INPUT_NUM = 16, 16, 32, 4, 2  # two fused pre-models -> L = 2
    key = jax.random.PRNGKey(0)
    k_src, k_par = jax.random.split(key)
    src = jax.random.normal(k_src, (B, FEAT), jnp.float32)
    params = make_params(k_par, NUM_CLASS, D, INPUT_NUM, FEAT)

    # full Predictor forward (bf16 matmul operands, single-block batch)
    rec, out = jax.jit(predictor_forward)(src, params)
    out = jax.block_until_ready(out)
    assert out.shape == (B, NUM_CLASS)

    # correctness checks vs pure-JAX HIGHEST-precision reference of FC_Decoder
    _, hs_t = pre_model_transformer(src, params)
    _, hs_m = pre_model_mamba(src, params)
    hs = jnp.concatenate([hs_t, hs_m], axis=0)
    with jax.default_matmul_precision("highest"):
        out_ref = fc_decoder_ref(hs, params)

    # f32-operand path (tight tolerance), grid of 2 "parallel" batch blocks
    out_f32 = jax.block_until_ready(
        fc_decoder_forward(hs, params, block_b=8, matmul_dtype=jnp.float32))
    if not jnp.allclose(out_f32, out_ref, atol=2e-3, rtol=2e-3):
        raise AssertionError("Pallas kernel (f32 matmuls) mismatch vs reference")

    # bf16-operand path (perf configuration), looser tolerance
    out_bf16 = jax.block_until_ready(
        fc_decoder_forward(hs, params, block_b=8, matmul_dtype=jnp.bfloat16))
    if not jnp.allclose(out_bf16, out_ref, atol=1e-2, rtol=1e-2):
        raise AssertionError("Pallas kernel (bf16 matmuls) mismatch vs reference")

    print("KERNEL_OK")
</pallas_src>

<mosaic_0001>
module attributes {stable_mosaic.version = 11 : i64} {
  func.func @fc_decoder_kernel(%arg0: i32, %arg1: memref<16x64xf32, #tpu.memory_space<vmem>>, %arg2: memref<64x256xbf16, #tpu.memory_space<vmem>>, %arg3: memref<4x64xf32, #tpu.memory_space<vmem>>, %arg4: memref<1x64xf32, #tpu.memory_space<vmem>>, %arg5: memref<128x256xbf16, #tpu.memory_space<vmem>>, %arg6: memref<1x64xf32, #tpu.memory_space<vmem>>, %arg7: memref<8x128xf32, #tpu.memory_space<vmem>>, %arg8: memref<1x64xf32, #tpu.memory_space<vmem>>, %arg9: memref<128x32xbf16, #tpu.memory_space<vmem>>, %arg10: memref<1x32xf32, #tpu.memory_space<vmem>>, %arg11: memref<32x32xbf16, #tpu.memory_space<vmem>>, %arg12: memref<1x32xf32, #tpu.memory_space<vmem>>, %arg13: memref<32x128xbf16, #tpu.memory_space<vmem>>, %arg14: memref<1x128xf32, #tpu.memory_space<vmem>>, %arg15: memref<16x128xf32, #tpu.memory_space<vmem>>) attributes {dimension_semantics = [#tpu.dimension_semantics<parallel>], iteration_bounds = array<i64: 1>, scalar_prefetch = 0 : i64, scratch_operands = 0 : i64, tpu.core_type = #tpu.core_type<tc>, window_params = [{transform_indices = @transform_0, window_bounds = array<i64: 16, 64>}, {pipeline_mode = #tpu.pipeline_mode<synchronous>, transform_indices = @transform_1, window_bounds = array<i64: 64, 256>}, {pipeline_mode = #tpu.pipeline_mode<synchronous>, transform_indices = @transform_2, window_bounds = array<i64: 4, 64>}, {pipeline_mode = #tpu.pipeline_mode<synchronous>, transform_indices = @transform_3, window_bounds = array<i64: 1, 64>}, {pipeline_mode = #tpu.pipeline_mode<synchronous>, transform_indices = @transform_4, window_bounds = array<i64: 128, 256>}, {pipeline_mode = #tpu.pipeline_mode<synchronous>, transform_indices = @transform_5, window_bounds = array<i64: 1, 64>}, {pipeline_mode = #tpu.pipeline_mode<synchronous>, transform_indices = @transform_6, window_bounds = array<i64: 8, 128>}, {pipeline_mode = #tpu.pipeline_mode<synchronous>, transform_indices = @transform_7, window_bounds = array<i64: 1, 64>}, {pipeline_mode = #tpu.pipeline_mode<synchronous>, transform_indices = @transform_8, window_bounds = array<i64: 128, 32>}, {pipeline_mode = #tpu.pipeline_mode<synchronous>, transform_indices = @transform_9, window_bounds = array<i64: 1, 32>}, {pipeline_mode = #tpu.pipeline_mode<synchronous>, transform_indices = @transform_10, window_bounds = array<i64: 32, 32>}, {pipeline_mode = #tpu.pipeline_mode<synchronous>, transform_indices = @transform_11, window_bounds = array<i64: 1, 32>}, {pipeline_mode = #tpu.pipeline_mode<synchronous>, transform_indices = @transform_12, window_bounds = array<i64: 32, 128>}, {pipeline_mode = #tpu.pipeline_mode<synchronous>, transform_indices = @transform_13, window_bounds = array<i64: 1, 128>}, {transform_indices = @transform_14, window_bounds = array<i64: 16, 128>}]} {
    %c0 = arith.constant 0 : index
    %c0_0 = arith.constant 0 : index
    %0 = vector.load %arg2[%c0, %c0_0] : memref<64x256xbf16, #tpu.memory_space<vmem>>, vector<64x256xbf16>
    %c0_1 = arith.constant 0 : index
    %c0_2 = arith.constant 0 : index
    %1 = vector.load %arg3[%c0_1, %c0_2] : memref<4x64xf32, #tpu.memory_space<vmem>>, vector<4x64xf32>
    %c0_3 = arith.constant 0 : index
    %c0_4 = arith.constant 0 : index
    %2 = vector.load %arg4[%c0_3, %c0_4] : memref<1x64xf32, #tpu.memory_space<vmem>>, vector<1x64xf32>
    %c0_5 = arith.constant 0 : index
    %c0_6 = arith.constant 0 : index
    %3 = vector.load %arg5[%c0_5, %c0_6] : memref<128x256xbf16, #tpu.memory_space<vmem>>, vector<128x256xbf16>
    %c0_7 = arith.constant 0 : index
    %c0_8 = arith.constant 0 : index
    %4 = vector.load %arg6[%c0_7, %c0_8] : memref<1x64xf32, #tpu.memory_space<vmem>>, vector<1x64xf32>
    %c0_9 = arith.constant 0 : index
    %c0_10 = arith.constant 0 : index
    %5 = vector.load %arg7[%c0_9, %c0_10] : memref<8x128xf32, #tpu.memory_space<vmem>>, vector<8x128xf32>
    %c0_11 = arith.constant 0 : index
    %c0_12 = arith.constant 0 : index
    %6 = vector.load %arg8[%c0_11, %c0_12] : memref<1x64xf32, #tpu.memory_space<vmem>>, vector<1x64xf32>
    %c0_13 = arith.constant 0 : index
    %c0_14 = arith.constant 0 : index
    %7 = vector.load %arg1[%c0_13, %c0_14] : memref<16x64xf32, #tpu.memory_space<vmem>>, vector<16x64xf32>
    %8 = arith.truncf %7 : vector<16x64xf32> to vector<16x64xbf16>
    %cst = arith.constant dense<0.000000e+00> : vector<16x256xf32>
    %9 = tpu.matmul %8, %0, %cst {dimension_numbers = #tpu.dot_dimension_numbers<[1], [0], [0], [1], [0, 0, 1, 1], [], []>} : vector<16x64xbf16>, vector<64x256xbf16>, vector<16x256xf32> -> vector<16x256xf32>
    %10 = vector.extract_strided_slice %9 {offsets = [0, 0], sizes = [16, 64], strides = [1, 1]} : vector<16x256xf32> to vector<16x64xf32>
    %11 = vector.extract_strided_slice %9 {offsets = [0, 128], sizes = [16, 64], strides = [1, 1]} : vector<16x256xf32> to vector<16x64xf32>
    %12 = vector.extract_strided_slice %9 {offsets = [0, 64], sizes = [16, 64], strides = [1, 1]} : vector<16x256xf32> to vector<16x64xf32>
    %13 = vector.extract_strided_slice %9 {offsets = [0, 192], sizes = [16, 64], strides = [1, 1]} : vector<16x256xf32> to vector<16x64xf32>
    %14 = vector.extract_strided_slice %1 {offsets = [2, 0], sizes = [1, 64], strides = [1, 1]} : vector<4x64xf32> to vector<1x64xf32>
    %15 = vector.extract_strided_slice %1 {offsets = [3, 0], sizes = [1, 64], strides = [1, 1]} : vector<4x64xf32> to vector<1x64xf32>
    %16 = vector.broadcast %15 : vector<1x64xf32> to vector<16x64xf32>
    %17 = arith.mulf %10, %16 : vector<16x64xf32>
    %18 = vector.broadcast %2 : vector<1x64xf32> to vector<16x64xf32>
    %19 = arith.addf %17, %18 : vector<16x64xf32>
    %20 = arith.negf %19 : vector<16x64xf32>
    %21 = math.exp %20 : vector<16x64xf32>
    %cst_15 = arith.constant 1.000000e+00 : f32
    %22 = vector.broadcast %cst_15 : f32 to vector<16x64xf32>
    %23 = arith.addf %22, %21 : vector<16x64xf32>
    %24 = arith.divf %22, %23 : vector<16x64xf32>
    %25 = arith.mulf %19, %24 : vector<16x64xf32>
    %26 = vector.broadcast %14 : vector<1x64xf32> to vector<16x64xf32>
    %27 = arith.mulf %10, %26 : vector<16x64xf32>
    %28 = vector.broadcast %15 : vector<1x64xf32> to vector<16x64xf32>
    %29 = arith.mulf %11, %28 : vector<16x64xf32>
    %30 = arith.addf %27, %29 : vector<16x64xf32>
    %31 = vector.broadcast %2 : vector<1x64xf32> to vector<16x64xf32>
    %32 = arith.addf %30, %31 : vector<16x64xf32>
    %33 = arith.negf %32 : vector<16x64xf32>
    %34 = math.exp %33 : vector<16x64xf32>
    %cst_16 = arith.constant 1.000000e+00 : f32
    %35 = vector.broadcast %cst_16 : f32 to vector<16x64xf32>
    %36 = arith.addf %35, %34 : vector<16x64xf32>
    %37 = arith.divf %35, %36 : vector<16x64xf32>
    %38 = arith.mulf %32, %37 : vector<16x64xf32>
    %39 = tpu.concatenate %25, %38 in 1 : vector<16x64xf32>, vector<16x64xf32> -> vector<16x128xf32>
    %40 = arith.truncf %39 : vector<16x128xf32> to vector<16x128xbf16>
    %cst_17 = arith.constant dense<0.000000e+00> : vector<16x256xf32>
    %41 = tpu.matmul %40, %3, %cst_17 {dimension_numbers = #tpu.dot_dimension_numbers<[1], [0], [0], [1], [0, 0, 1, 1], [], []>} : vector<16x128xbf16>, vector<128x256xbf16>, vector<16x256xf32> -> vector<16x256xf32>
    %cst_18 = arith.constant 0.000000e+00 : f32
    %42 = vector.broadcast %cst_18 : f32 to vector<16x8x128xf32>
    %43 = vector.extract_strided_slice %41 {offsets = [0, 0], sizes = [16, 64], strides = [1, 1]} : vector<16x256xf32> to vector<16x64xf32>
    %44 = vector.broadcast %4 : vector<1x64xf32> to vector<16x64xf32>
    %45 = arith.addf %43, %44 : vector<16x64xf32>
    %cst_19 = arith.constant 2.000000e+01 : f32
    %46 = vector.broadcast %cst_19 : f32 to vector<16x64xf32>
    %47 = arith.cmpf ogt, %45, %46 : vector<16x64xf32>
    %cst_20 = arith.constant 2.000000e+01 : f32
    %48 = vector.broadcast %cst_20 : f32 to vector<16x64xf32>
    %49 = arith.minimumf %45, %48 : vector<16x64xf32>
    %50 = math.exp %49 : vector<16x64xf32>
    %51 = math.log1p %50 : vector<16x64xf32>
    %52 = arith.select %47, %45, %51 : vector<16x64xi1>, vector<16x64xf32>
    %53 = vector.extract_strided_slice %41 {offsets = [0, 64], sizes = [16, 16], strides = [1, 1]} : vector<16x256xf32> to vector<16x16xf32>
    %54 = vector.extract_strided_slice %41 {offsets = [0, 80], sizes = [16, 16], strides = [1, 1]} : vector<16x256xf32> to vector<16x16xf32>
    %55 = tpu.concatenate %52, %52 in 1 : vector<16x64xf32>, vector<16x64xf32> -> vector<16x128xf32>
    %56 = arith.mulf %52, %25 : vector<16x64xf32>
    %57 = tpu.concatenate %56, %56 in 1 : vector<16x64xf32>, vector<16x64xf32> -> vector<16x128xf32>
    %58 = vector.extract_strided_slice %53 {offsets = [0, 0], sizes = [16, 8], strides = [1, 1]} : vector<16x16xf32> to vector<16x8xf32>
    %59 = vector.shape_cast %58 : vector<16x8xf32> to vector<16x8x1xf32>
    %60 = vector.shape_cast %59 : vector<16x8x1xf32> to vector<16x8x1xf32>
    %61 = vector.broadcast %60 : vector<16x8x1xf32> to vector<16x8x64xf32>
    %62 = vector.extract_strided_slice %53 {offsets = [0, 8], sizes = [16, 8], strides = [1, 1]} : vector<16x16xf32> to vector<16x8xf32>
    %63 = vector.shape_cast %62 : vector<16x8xf32> to vector<16x8x1xf32>
    %64 = vector.shape_cast %63 : vector<16x8x1xf32> to vector<16x8x1xf32>
    %65 = vector.broadcast %64 : vector<16x8x1xf32> to vector<16x8x64xf32>
    %66 = tpu.concatenate %61, %65 in 2 : vector<16x8x64xf32>, vector<16x8x64xf32> -> vector<16x8x128xf32>
    %67 = vector.extract_strided_slice %54 {offsets = [0, 0], sizes = [16, 8], strides = [1, 1]} : vector<16x16xf32> to vector<16x8xf32>
    %68 = vector.shape_cast %67 : vector<16x8xf32> to vector<16x8x1xf32>
    %69 = vector.shape_cast %68 : vector<16x8x1xf32> to vector<16x8x1xf32>
    %70 = vector.broadcast %69 : vector<16x8x1xf32> to vector<16x8x64xf32>
    %71 = vector.extract_strided_slice %54 {offsets = [0, 8], sizes = [16, 8], strides = [1, 1]} : vector<16x16xf32> to vector<16x8xf32>
    %72 = vector.shape_cast %71 : vector<16x8xf32> to vector<16x8x1xf32>
    %73 = vector.shape_cast %72 : vector<16x8x1xf32> to vector<16x8x1xf32>
    %74 = vector.broadcast %73 : vector<16x8x1xf32> to vector<16x8x64xf32>
    %75 = tpu.concatenate %70, %74 in 2 : vector<16x8x64xf32>, vector<16x8x64xf32> -> vector<16x8x128xf32>
    %76 = vector.shape_cast %55 : vector<16x128xf32> to vector<16x1x128xf32>
    %77 = vector.shape_cast %5 : vector<8x128xf32> to vector<1x8x128xf32>
    %78 = vector.broadcast %76 : vector<16x1x128xf32> to vector<16x8x128xf32>
    %79 = vector.broadcast %77 : vector<1x8x128xf32> to vector<16x8x128xf32>
    %80 = arith.mulf %78, %79 : vector<16x8x128xf32>
    %81 = math.exp %80 : vector<16x8x128xf32>
    %82 = arith.mulf %81, %42 : vector<16x8x128xf32>
    %83 = vector.shape_cast %57 : vector<16x128xf32> to vector<16x1x128xf32>
    %84 = vector.broadcast %83 : vector<16x1x128xf32> to vector<16x8x128xf32>
    %85 = arith.mulf %84, %66 : vector<16x8x128xf32>
    %86 = arith.addf %82, %85 : vector<16x8x128xf32>
    %87 = arith.mulf %86, %75 : vector<16x8x128xf32>
    %cst_21 = arith.constant dense<0.000000e+00> : vector<16x128xf32>
    %88 = vector.multi_reduction <add>, %87, %cst_21 [1] : vector<16x8x128xf32> to vector<16x128xf32>
    %89 = vector.extract_strided_slice %88 {offsets = [0, 0], sizes = [16, 64], strides = [1, 1]} : vector<16x128xf32> to vector<16x64xf32>
    %90 = vector.extract_strided_slice %88 {offsets = [0, 64], sizes = [16, 64], strides = [1, 1]} : vector<16x128xf32> to vector<16x64xf32>
    %91 = arith.addf %89, %90 : vector<16x64xf32>
    %92 = vector.broadcast %6 : vector<1x64xf32> to vector<16x64xf32>
    %93 = arith.mulf %92, %25 : vector<16x64xf32>
    %94 = arith.addf %91, %93 : vector<16x64xf32>
    %95 = arith.negf %12 : vector<16x64xf32>
    %96 = math.exp %95 : vector<16x64xf32>
    %cst_22 = arith.constant 1.000000e+00 : f32
    %97 = vector.broadcast %cst_22 : f32 to vector<16x64xf32>
    %98 = arith.addf %97, %96 : vector<16x64xf32>
    %99 = arith.divf %97, %98 : vector<16x64xf32>
    %100 = arith.mulf %12, %99 : vector<16x64xf32>
    %101 = arith.mulf %94, %100 : vector<16x64xf32>
    %102 = vector.extract_strided_slice %41 {offsets = [0, 128], sizes = [16, 64], strides = [1, 1]} : vector<16x256xf32> to vector<16x64xf32>
    %103 = vector.broadcast %4 : vector<1x64xf32> to vector<16x64xf32>
    %104 = arith.addf %102, %103 : vector<16x64xf32>
    %cst_23 = arith.constant 2.000000e+01 : f32
    %105 = vector.broadcast %cst_23 : f32 to vector<16x64xf32>
    %106 = arith.cmpf ogt, %104, %105 : vector<16x64xf32>
    %cst_24 = arith.constant 2.000000e+01 : f32
    %107 = vector.broadcast %cst_24 : f32 to vector<16x64xf32>
    %108 = arith.minimumf %104, %107 : vector<16x64xf32>
    %109 = math.exp %108 : vector<16x64xf32>
    %110 = math.log1p %109 : vector<16x64xf32>
    %111 = arith.select %106, %104, %110 : vector<16x64xi1>, vector<16x64xf32>
    %112 = vector.extract_strided_slice %41 {offsets = [0, 192], sizes = [16, 16], strides = [1, 1]} : vector<16x256xf32> to vector<16x16xf32>
    %113 = vector.extract_strided_slice %41 {offsets = [0, 208], sizes = [16, 16], strides = [1, 1]} : vector<16x256xf32> to vector<16x16xf32>
    %114 = tpu.concatenate %111, %111 in 1 : vector<16x64xf32>, vector<16x64xf32> -> vector<16x128xf32>
    %115 = arith.mulf %111, %38 : vector<16x64xf32>
    %116 = tpu.concatenate %115, %115 in 1 : vector<16x64xf32>, vector<16x64xf32> -> vector<16x128xf32>
    %117 = vector.extract_strided_slice %112 {offsets = [0, 0], sizes = [16, 8], strides = [1, 1]} : vector<16x16xf32> to vector<16x8xf32>
    %118 = vector.shape_cast %117 : vector<16x8xf32> to vector<16x8x1xf32>
    %119 = vector.shape_cast %118 : vector<16x8x1xf32> to vector<16x8x1xf32>
    %120 = vector.broadcast %119 : vector<16x8x1xf32> to vector<16x8x64xf32>
    %121 = vector.extract_strided_slice %112 {offsets = [0, 8], sizes = [16, 8], strides = [1, 1]} : vector<16x16xf32> to vector<16x8xf32>
    %122 = vector.shape_cast %121 : vector<16x8xf32> to vector<16x8x1xf32>
    %123 = vector.shape_cast %122 : vector<16x8x1xf32> to vector<16x8x1xf32>
    %124 = vector.broadcast %123 : vector<16x8x1xf32> to vector<16x8x64xf32>
    %125 = tpu.concatenate %120, %124 in 2 : vector<16x8x64xf32>, vector<16x8x64xf32> -> vector<16x8x128xf32>
    %126 = vector.extract_strided_slice %113 {offsets = [0, 0], sizes = [16, 8], strides = [1, 1]} : vector<16x16xf32> to vector<16x8xf32>
    %127 = vector.shape_cast %126 : vector<16x8xf32> to vector<16x8x1xf32>
    %128 = vector.shape_cast %127 : vector<16x8x1xf32> to vector<16x8x1xf32>
    %129 = vector.broadcast %128 : vector<16x8x1xf32> to vector<16x8x64xf32>
    %130 = vector.extract_strided_slice %113 {offsets = [0, 8], sizes = [16, 8], strides = [1, 1]} : vector<16x16xf32> to vector<16x8xf32>
    %131 = vector.shape_cast %130 : vector<16x8xf32> to vector<16x8x1xf32>
    %132 = vector.shape_cast %131 : vector<16x8x1xf32> to vector<16x8x1xf32>
    %133 = vector.broadcast %132 : vector<16x8x1xf32> to vector<16x8x64xf32>
    %134 = tpu.concatenate %129, %133 in 2 : vector<16x8x64xf32>, vector<16x8x64xf32> -> vector<16x8x128xf32>
    %135 = vector.shape_cast %114 : vector<16x128xf32> to vector<16x1x128xf32>
    %136 = vector.shape_cast %5 : vector<8x128xf32> to vector<1x8x128xf32>
    %137 = vector.broadcast %135 : vector<16x1x128xf32> to vector<16x8x128xf32>
    %138 = vector.broadcast %136 : vector<1x8x128xf32> to vector<16x8x128xf32>
    %139 = arith.mulf %137, %138 : vector<16x8x128xf32>
    %140 = math.exp %139 : vector<16x8x128xf32>
    %141 = arith.mulf %140, %86 : vector<16x8x128xf32>
    %142 = vector.shape_cast %116 : vector<16x128xf32> to vector<16x1x128xf32>
    %143 = vector.broadcast %142 : vector<16x1x128xf32> to vector<16x8x128xf32>
    %144 = arith.mulf %143, %125 : vector<16x8x128xf32>
    %145 = arith.addf %141, %144 : vector<16x8x128xf32>
    %146 = arith.mulf %145, %134 : vector<16x8x128xf32>
    %cst_25 = arith.constant dense<0.000000e+00> : vector<16x128xf32>
    %147 = vector.multi_reduction <add>, %146, %cst_25 [1] : vector<16x8x128xf32> to vector<16x128xf32>
    %148 = vector.extract_strided_slice %147 {offsets = [0, 0], sizes = [16, 64], strides = [1, 1]} : vector<16x128xf32> to vector<16x64xf32>
    %149 = vector.extract_strided_slice %147 {offsets = [0, 64], sizes = [16, 64], strides = [1, 1]} : vector<16x128xf32> to vector<16x64xf32>
    %150 = arith.addf %148, %149 : vector<16x64xf32>
    %151 = vector.broadcast %6 : vector<1x64xf32> to vector<16x64xf32>
    %152 = arith.mulf %151, %38 : vector<16x64xf32>
    %153 = arith.addf %150, %152 : vector<16x64xf32>
    %154 = arith.negf %13 : vector<16x64xf32>
    %155 = math.exp %154 : vector<16x64xf32>
    %cst_26 = arith.constant 1.000000e+00 : f32
    %156 = vector.broadcast %cst_26 : f32 to vector<16x64xf32>
    %157 = arith.addf %156, %155 : vector<16x64xf32>
    %158 = arith.divf %156, %157 : vector<16x64xf32>
    %159 = arith.mulf %13, %158 : vector<16x64xf32>
    %160 = arith.mulf %153, %159 : vector<16x64xf32>
    %161 = tpu.concatenate %101, %160 in 1 : vector<16x64xf32>, vector<16x64xf32> -> vector<16x128xf32>
    %c0_27 = arith.constant 0 : index
    %c0_28 = arith.constant 0 : index
    %162 = vector.load %arg9[%c0_27, %c0_28] : memref<128x32xbf16, #tpu.memory_space<vmem>>, vector<128x32xbf16>
    %163 = arith.truncf %161 : vector<16x128xf32> to vector<16x128xbf16>
    %cst_29 = arith.constant dense<0.000000e+00> : vector<16x32xf32>
    %164 = tpu.matmul %163, %162, %cst_29 {dimension_numbers = #tpu.dot_dimension_numbers<[1], [0], [0], [1], [0, 0, 1, 1], [], []>} : vector<16x128xbf16>, vector<128x32xbf16>, vector<16x32xf32> -> vector<16x32xf32>
    %c0_30 = arith.constant 0 : index
    %c0_31 = arith.constant 0 : index
    %165 = vector.load %arg10[%c0_30, %c0_31] : memref<1x32xf32, #tpu.memory_space<vmem>>, vector<1x32xf32>
    %166 = vector.broadcast %165 : vector<1x32xf32> to vector<16x32xf32>
    %167 = arith.addf %164, %166 : vector<16x32xf32>
    %cst_32 = arith.constant 0.000000e+00 : f32
    %168 = vector.broadcast %cst_32 : f32 to vector<16x32xf32>
    %169 = arith.maximumf %167, %168 : vector<16x32xf32>
    %c0_33 = arith.constant 0 : index
    %c0_34 = arith.constant 0 : index
    %170 = vector.load %arg11[%c0_33, %c0_34] : memref<32x32xbf16, #tpu.memory_space<vmem>>, vector<32x32xbf16>
    %171 = arith.truncf %169 : vector<16x32xf32> to vector<16x32xbf16>
    %cst_35 = arith.constant dense<0.000000e+00> : vector<16x32xf32>
    %172 = tpu.matmul %171, %170, %cst_35 {dimension_numbers = #tpu.dot_dimension_numbers<[1], [0], [0], [1], [0, 0, 1, 1], [], []>} : vector<16x32xbf16>, vector<32x32xbf16>, vector<16x32xf32> -> vector<16x32xf32>
    %c0_36 = arith.constant 0 : index
    %c0_37 = arith.constant 0 : index
    %173 = vector.load %arg12[%c0_36, %c0_37] : memref<1x32xf32, #tpu.memory_space<vmem>>, vector<1x32xf32>
    %174 = vector.broadcast %173 : vector<1x32xf32> to vector<16x32xf32>
    %175 = arith.addf %172, %174 : vector<16x32xf32>
    %176 = arith.negf %175 : vector<16x32xf32>
    %177 = math.exp %176 : vector<16x32xf32>
    %cst_38 = arith.constant 1.000000e+00 : f32
    %178 = vector.broadcast %cst_38 : f32 to vector<16x32xf32>
    %179 = arith.addf %178, %177 : vector<16x32xf32>
    %180 = arith.divf %178, %179 : vector<16x32xf32>
    %c0_39 = arith.constant 0 : index
    %c0_40 = arith.constant 0 : index
    %181 = vector.load %arg13[%c0_39, %c0_40] : memref<32x128xbf16, #tpu.memory_space<vmem>>, vector<32x128xbf16>
    %182 = arith.truncf %180 : vector<16x32xf32> to vector<16x32xbf16>
    %cst_41 = arith.constant dense<0.000000e+00> : vector<16x128xf32>
    %183 = tpu.matmul %182, %181, %cst_41 {dimension_numbers = #tpu.dot_dimension_numbers<[1], [0], [0], [1], [0, 0, 1, 1], [], []>} : vector<16x32xbf16>, vector<32x128xbf16>, vector<16x128xf32> -> vector<16x128xf32>
    %c0_42 = arith.constant 0 : index
    %c0_43 = arith.constant 0 : index
    %184 = vector.load %arg14[%c0_42, %c0_43] : memref<1x128xf32, #tpu.memory_space<vmem>>, vector<1x128xf32>
    %185 = vector.broadcast %184 : vector<1x128xf32> to vector<16x128xf32>
    %186 = arith.addf %183, %185 : vector<16x128xf32>
    %c0_44 = arith.constant 0 : index
    %c0_45 = arith.constant 0 : index
    %187 = vector.load %arg15[%c0_44, %c0_45] : memref<16x128xf32, #tpu.memory_space<vmem>>, vector<16x128xf32>
    tpu.vector_store %arg15[%c0_44, %c0_45], %186 {strides = array<i32>} : memref<16x128xf32, #tpu.memory_space<vmem>>, vector<16x128xf32>,
    return
  }
  func.func @transform_0(%arg0: i32) -> (i32, i32) {
    %c0_i32 = arith.constant 0 : i32
    %c0_i32_0 = arith.constant 0 : i32
    return %arg0, %c0_i32 : i32, i32
  }
  func.func @transform_1(%arg0: i32) -> (i32, i32) {
    %c0_i32 = arith.constant 0 : i32
    %c0_i32_0 = arith.constant 0 : i32
    %c0_i32_1 = arith.constant 0 : i32
    return %c0_i32, %c0_i32_0 : i32, i32
  }
  func.func @transform_2(%arg0: i32) -> (i32, i32) {
    %c0_i32 = arith.constant 0 : i32
    %c0_i32_0 = arith.constant 0 : i32
    %c0_i32_1 = arith.constant 0 : i32
    return %c0_i32, %c0_i32_0 : i32, i32
  }
  func.func @transform_3(%arg0: i32) -> (i32, i32) {
    %c0_i32 = arith.constant 0 : i32
    %c0_i32_0 = arith.constant 0 : i32
    %c0_i32_1 = arith.constant 0 : i32
    return %c0_i32, %c0_i32_0 : i32, i32
  }
  func.func @transform_4(%arg0: i32) -> (i32, i32) {
    %c0_i32 = arith.constant 0 : i32
    %c0_i32_0 = arith.constant 0 : i32
    %c0_i32_1 = arith.constant 0 : i32
    return %c0_i32, %c0_i32_0 : i32, i32
  }
  func.func @transform_5(%arg0: i32) -> (i32, i32) {
    %c0_i32 = arith.constant 0 : i32
    %c0_i32_0 = arith.constant 0 : i32
    %c0_i32_1 = arith.constant 0 : i32
    return %c0_i32, %c0_i32_0 : i32, i32
  }
  func.func @transform_6(%arg0: i32) -> (i32, i32) {
    %c0_i32 = arith.constant 0 : i32
    %c0_i32_0 = arith.constant 0 : i32
    %c0_i32_1 = arith.constant 0 : i32
    return %c0_i32, %c0_i32_0 : i32, i32
  }
  func.func @transform_7(%arg0: i32) -> (i32, i32) {
    %c0_i32 = arith.constant 0 : i32
    %c0_i32_0 = arith.constant 0 : i32
    %c0_i32_1 = arith.constant 0 : i32
    return %c0_i32, %c0_i32_0 : i32, i32
  }
  func.func @transform_8(%arg0: i32) -> (i32, i32) {
    %c0_i32 = arith.constant 0 : i32
    %c0_i32_0 = arith.constant 0 : i32
    %c0_i32_1 = arith.constant 0 : i32
    return %c0_i32, %c0_i32_0 : i32, i32
  }
  func.func @transform_9(%arg0: i32) -> (i32, i32) {
    %c0_i32 = arith.constant 0 : i32
    %c0_i32_0 = arith.constant 0 : i32
    %c0_i32_1 = arith.constant 0 : i32
    return %c0_i32, %c0_i32_0 : i32, i32
  }
  func.func @transform_10(%arg0: i32) -> (i32, i32) {
    %c0_i32 = arith.constant 0 : i32
    %c0_i32_0 = arith.constant 0 : i32
    %c0_i32_1 = arith.constant 0 : i32
    return %c0_i32, %c0_i32_0 : i32, i32
  }
  func.func @transform_11(%arg0: i32) -> (i32, i32) {
    %c0_i32 = arith.constant 0 : i32
    %c0_i32_0 = arith.constant 0 : i32
    %c0_i32_1 = arith.constant 0 : i32
    return %c0_i32, %c0_i32_0 : i32, i32
  }
  func.func @transform_12(%arg0: i32) -> (i32, i32) {
    %c0_i32 = arith.constant 0 : i32
    %c0_i32_0 = arith.constant 0 : i32
    %c0_i32_1 = arith.constant 0 : i32
    return %c0_i32, %c0_i32_0 : i32, i32
  }
  func.func @transform_13(%arg0: i32) -> (i32, i32) {
    %c0_i32 = arith.constant 0 : i32
    %c0_i32_0 = arith.constant 0 : i32
    %c0_i32_1 = arith.constant 0 : i32
    return %c0_i32, %c0_i32_0 : i32, i32
  }
  func.func @transform_14(%arg0: i32) -> (i32, i32) {
    %c0_i32 = arith.constant 0 : i32
    %c0_i32_0 = arith.constant 0 : i32
    return %arg0, %c0_i32 : i32, i32
  }
}

</mosaic_0001>

<llo_original>
// kernel: predictor_forward.1
$region0: #{predictor_forward.1}
  #allocation0 [shape = 'u32[]', space=smem, size = 0x4, offset = 0x4, fixed_abs, tag = 'smem constant byte address 0x4 - core index']
  #allocation1 [shape = 'u32[144,128]{1,0:T(1,128)}', space=vmem, size = 0x12000, scoped, tag = 'internal scratch']
  %s0 = inlined_call_operand.vmem [shape: f32[16,64], index: 0, kind: input, shape index: {}]
  %s1 = inlined_call_operand.vmem [shape: bf16[64,256], index: 1, kind: input, shape index: {}]
  %s2 = inlined_call_operand.vmem [shape: f32[4,64], index: 2, kind: input, shape index: {}]
  %s3 = inlined_call_operand.vmem [shape: f32[1,64], index: 3, kind: input, shape index: {}]
  %s4 = inlined_call_operand.vmem [shape: bf16[128,256], index: 4, kind: input, shape index: {}]
  %s5 = inlined_call_operand.vmem [shape: f32[1,64], index: 5, kind: input, shape index: {}]
  %s6 = inlined_call_operand.vmem [shape: f32[8,128], index: 6, kind: input, shape index: {}]
  %s7 = inlined_call_operand.vmem [shape: f32[1,64], index: 7, kind: input, shape index: {}]
  %s8 = inlined_call_operand.vmem [shape: bf16[128,32], index: 8, kind: input, shape index: {}]
  %s9 = inlined_call_operand.vmem [shape: f32[1,32], index: 9, kind: input, shape index: {}]
  %s10 = inlined_call_operand.vmem [shape: bf16[32,32], index: 10, kind: input, shape index: {}]
  %s11 = inlined_call_operand.vmem [shape: f32[1,32], index: 11, kind: input, shape index: {}]
  %s12 = inlined_call_operand.vmem [shape: bf16[32,128], index: 12, kind: input, shape index: {}]
  %s13 = inlined_call_operand.vmem [shape: f32[1,128], index: 13, kind: input, shape index: {}]
  %s14 = inlined_call_operand.vmem [shape: f32[16,128], index: 14, kind: output, shape index: {}]
  %s15 = sld [smem:[#allocation0]]
  $region66: #{predictor_forward.1} parent=0
    _
  %s17 = ssub.s32 1, %s15
  %s18 = scalar_select 0, %s17, %s15
  // Predicated region
  $region2: #{predictor_forward.1} parent=0 // pred_check
    _
  $region3: #{predictor_forward.1} parent=0 // pred_check_branch
    %20 = sbr.rel (0) target = $region5
  $region4: #{predictor_forward.1} parent=0 // pred_region
    _
  $region5: #{predictor_forward.1} parent=0 // pred_fallthru
    _
  // Predicated region
  $region6: #{predictor_forward.1} parent=0 // pred_check
    _
  $region7: #{predictor_forward.1} parent=0 // pred_check_branch
    %22 = sbr.rel (0) target = $region9
  $region8: #{predictor_forward.1} parent=0 // pred_region
    _
  $region9: #{predictor_forward.1} parent=0 // pred_fallthru
    _
  // Predicated region
  $region10: #{predictor_forward.1} parent=0 // pred_check
    _
  $region11: #{predictor_forward.1} parent=0 // pred_check_branch
    %24 = sbr.rel (0) target = $region13
  $region12: #{predictor_forward.1} parent=0 // pred_region
    _
  $region13: #{predictor_forward.1} parent=0 // pred_fallthru
    _
  // Predicated region
  $region14: #{predictor_forward.1} parent=0 // pred_check
    _
  $region15: #{predictor_forward.1} parent=0 // pred_check_branch
    %26 = sbr.rel (0) target = $region17
  $region16: #{predictor_forward.1} parent=0 // pred_region
    _
  $region17: #{predictor_forward.1} parent=0 // pred_fallthru
    _
  // Predicated region
  $region18: #{predictor_forward.1} parent=0 // pred_check
    _
  $region19: #{predictor_forward.1} parent=0 // pred_check_branch
    %28 = sbr.rel (0) target = $region21
  $region20: #{predictor_forward.1} parent=0 // pred_region
    _
  $region21: #{predictor_forward.1} parent=0 // pred_fallthru
    _
  // Predicated region
  $region22: #{predictor_forward.1} parent=0 // pred_check
    _
  $region23: #{predictor_forward.1} parent=0 // pred_check_branch
    %30 = sbr.rel (0) target = $region25
  $region24: #{predictor_forward.1} parent=0 // pred_region
    _
  $region25: #{predictor_forward.1} parent=0 // pred_fallthru
    _
  // Predicated region
  $region26: #{predictor_forward.1} parent=0 // pred_check
    _
  $region27: #{predictor_forward.1} parent=0 // pred_check_branch
    %32 = sbr.rel (0) target = $region29
  $region28: #{predictor_forward.1} parent=0 // pred_region
    _
  $region29: #{predictor_forward.1} parent=0 // pred_fallthru
    _
  // Predicated region
  $region30: #{predictor_forward.1} parent=0 // pred_check
    _
  $region31: #{predictor_forward.1} parent=0 // pred_check_branch
    %34 = sbr.rel (0) target = $region33
  $region32: #{predictor_forward.1} parent=0 // pred_region
    _
  $region33: #{predictor_forward.1} parent=0 // pred_fallthru
    _
  // Predicated region
  $region34: #{predictor_forward.1} parent=0 // pred_check
    _
  $region35: #{predictor_forward.1} parent=0 // pred_check_branch
    %36 = sbr.rel (0) target = $region37
  $region36: #{predictor_forward.1} parent=0 // pred_region
    _
  $region37: #{predictor_forward.1} parent=0 // pred_fallthru
    _
  // Predicated region
  $region38: #{predictor_forward.1} parent=0 // pred_check
    _
  $region39: #{predictor_forward.1} parent=0 // pred_check_branch
    %38 = sbr.rel (0) target = $region41
  $region40: #{predictor_forward.1} parent=0 // pred_region
    _
  $region41: #{predictor_forward.1} parent=0 // pred_fallthru
    _
  // Predicated region
  $region42: #{predictor_forward.1} parent=0 // pred_check
    _
  $region43: #{predictor_forward.1} parent=0 // pred_check_branch
    %40 = sbr.rel (0) target = $region45
  $region44: #{predictor_forward.1} parent=0 // pred_region
    _
  $region45: #{predictor_forward.1} parent=0 // pred_fallthru
    _
  // Predicated region
  $region46: #{predictor_forward.1} parent=0 // pred_check
    _
  $region47: #{predictor_forward.1} parent=0 // pred_check_branch
    %42 = sbr.rel (0) target = $region49
  $region48: #{predictor_forward.1} parent=0 // pred_region
    _
  $region49: #{predictor_forward.1} parent=0 // pred_fallthru
    _
  // Predicated region
  $region50: #{predictor_forward.1} parent=0 // pred_check
    _
  $region51: #{predictor_forward.1} parent=0 // pred_check_branch
    %44 = sbr.rel (0) target = $region53
  $region52: #{predictor_forward.1} parent=0 // pred_region
    _
  $region53: #{predictor_forward.1} parent=0 // pred_fallthru
    _
  // Predicated region
  $region54: #{predictor_forward.1} parent=0 // pred_check
    _
  $region55: #{predictor_forward.1} parent=0 // pred_check_branch
    %46 = sbr.rel (0) target = $region57
  $region56: #{predictor_forward.1} parent=0 // pred_region
    _
  $region57: #{predictor_forward.1} parent=0 // pred_fallthru
    _
  %v48 = vld [vmem:[%s1] sm:$0xff]
  %v49 = vld [vmem:[%s1 + $0x8] sm:$0xff]
  %v50 = vld [vmem:[%s1 + $0x10] sm:$0xff]
  %v51 = vld [vmem:[%s1 + $0x18] sm:$0xff]
  %v52 = vld [vmem:[%s1 + $0x20] sm:$0xff]
  %v53 = vld [vmem:[%s1 + $0x28] sm:$0xff]
  %v54 = vld [vmem:[%s1 + $0x30] sm:$0xff]
  %v55 = vld [vmem:[%s1 + $0x38] sm:$0xff]
  %v56 = vld [vmem:[%s2] sm:$0xf]
  %v57 = vld [vmem:[%s3] sm:$0x1]
  %v58 = vld [vmem:[%s4] sm:$0xff]
  %v59 = vld [vmem:[%s4 + $0x8] sm:$0xff]
  %v60 = vld [vmem:[%s4 + $0x10] sm:$0xff]
  %v61 = vld [vmem:[%s4 + $0x18] sm:$0xff]
  %v62 = vld [vmem:[%s4 + $0x20] sm:$0xff]
  %v63 = vld [vmem:[%s4 + $0x28] sm:$0xff]
  %v64 = vld [vmem:[%s4 + $0x30] sm:$0xff]
  %v65 = vld [vmem:[%s4 + $0x38] sm:$0xff]
  %v66 = vld [vmem:[%s4 + $0x40] sm:$0xff]
  %v67 = vld [vmem:[%s4 + $0x48] sm:$0xff]
  %v68 = vld [vmem:[%s4 + $0x50] sm:$0xff]
  %v69 = vld [vmem:[%s4 + $0x58] sm:$0xff]
  %v70 = vld [vmem:[%s4 + $0x60] sm:$0xff]
  %v71 = vld [vmem:[%s4 + $0x68] sm:$0xff]
  %v72 = vld [vmem:[%s4 + $0x70] sm:$0xff]
  %v73 = vld [vmem:[%s4 + $0x78] sm:$0xff]
  %v74 = vld [vmem:[%s5] sm:$0x1]
  %v75 = vld [vmem:[%s6] sm:$0xff]
  %v76 = vld [vmem:[%s7] sm:$0x1]
  %v77 = vld [vmem:[%s0] sm:$0xff]
  %v78 = vld [vmem:[%s0 + $0x8] sm:$0xff]
  %v79 = vpack.c.bf16 %v78, %v77
  %v88 = vunpack.c.l.b16 %v48
  %v89 = vunpack.c.h.b16 %v48
  %v90 = vunpack.c.l.b16 %v49
  %v91 = vunpack.c.h.b16 %v49
  %v92 = vunpack.c.l.b16 %v50
  %v93 = vunpack.c.h.b16 %v50
  %v94 = vunpack.c.l.b16 %v51
  %v95 = vunpack.c.h.b16 %v51
  %v96 = vunpack.c.l.b16 %v52
  %v97 = vunpack.c.h.b16 %v52
  %v98 = vunpack.c.l.b16 %v53
  %v99 = vunpack.c.h.b16 %v53
  %v100 = vunpack.c.l.b16 %v54
  %v101 = vunpack.c.h.b16 %v54
  %v102 = vunpack.c.l.b16 %v55
  %v103 = vunpack.c.h.b16 %v55
  %v104 = vpack.c.b16 %v90, %v88
  %v105 = vpack.c.b16 %v91, %v89
  %v106 = vpack.c.b16 %v94, %v92
  %v107 = vpack.c.b16 %v95, %v93
  %v108 = vpack.c.b16 %v98, %v96
  %v109 = vpack.c.b16 %v99, %v97
  %v110 = vpack.c.b16 %v102, %v100
  %v111 = vpack.c.b16 %v103, %v101
  %vm120 = vcmask 523264
  %v122 = vsel %vm120, %v79, 0
  %124 = vmatprep.subr.bf16.mxu0 0
  %125 = vmatpush1.bf16.msra.mxu0 0
  %126 = vmatprep.subr.bf16.mxu0 0
  %127 = vmatpush1.bf16.msra.mxu0 0
  %128 = vmatprep.subr.bf16.mxu0 0
  %129 = vmatpush1.bf16.msra.mxu0 0
  %130 = vmatprep.subr.bf16.mxu0 0
  %131 = vmatpush1.bf16.msra.mxu0 0
  %132 = vmatprep.subr.bf16.mxu0 %v111
  %133 = vmatpush1.bf16.msra.mxu0 %v110
  %134 = vmatprep.subr.bf16.mxu0 %v109
  %135 = vmatpush1.bf16.msra.mxu0 %v108
  %136 = vmatprep.subr.bf16.mxu0 %v107
  %137 = vmatpush1.bf16.msra.mxu0 %v106
  %138 = vmatprep.subr.bf16.mxu0 %v105
  %139 = vmatpush1.bf16.msra.mxu0 %v104
  %140 = vmatprep.subr.bf16.mxu0 0
  %141 = vmatpush2.bf16.msra.mxu0 0
  %142 = vmatprep.subr.bf16.mxu0 0
  %143 = vmatpush2.bf16.msra.mxu0 0
  %144 = vmatprep.subr.bf16.mxu0 0
  %145 = vmatpush2.bf16.msra.mxu0 0
  %146 = vmatprep.subr.bf16.mxu0 0
  %147 = vmatpush2.bf16.msra.mxu0 0
  %148 = vmatprep.subr.bf16.mxu0 0
  %149 = vmatpush2.bf16.msra.mxu0 0
  %150 = vmatprep.subr.bf16.mxu0 0
  %151 = vmatpush2.bf16.msra.mxu0 0
  %152 = vmatprep.subr.bf16.mxu0 0
  %153 = vmatpush2.bf16.msra.mxu0 0
  %154 = vmatprep.subr.bf16.mxu0 0
  %155 = vmatpush2.bf16.msra.mxu0 0
  %156 = vmatprep.mubr.bf16.mxu0 0
  %157 = vmatmul.mubr.bf16.gmra.mxu0 %v122
  %v158 = vpop.f32.mrf.mxu0
  %v159 = vadd.f32 0.0, %v158
  %v160 = vpop.f32.mrf.mxu0
  %v161 = vadd.f32 0.0, %v160
  %v162 = vpop.f32.mrf.mxu0
  %v163 = vadd.f32 0.0, %v162
  %v164 = vpop.f32.mrf.mxu0
  %v165 = vadd.f32 0.0, %v164
  %166 = vdwg.mxu0
  %v167 = vlaneseq
  %v168 = vshrl.u32 %v167, 7
  %v169 = vsub.s32 3, %v168
  %v170 = vrot.slane %v56, %v169
  %v171 = vmul.f32 %v159, %v170
  %v172 = vmul.f32 %v163, %v170
  %v174 = vlaneseq
  %v175 = vshrl.u32 %v174, 7
  %v176 = vsub.s32 0, %v175
  %v177 = vrot.slane %v57, %v176
  %v179 = vadd.f32 %v171, %v177
  %v180 = vadd.f32 %v172, %v177
  %v181 = vxor.u32 %v179, 2147483648
  %v182 = vxor.u32 %v180, 2147483648
  %v183 = vmul.f32 %v181, 1.442695
  %v184 = vpow.pop %v183
  %v185 = vmul.f32 %v182, 1.442695
  %v186 = vpow.pop %v185
  %v187 = vadd.f32 %v184, 1.0
  %v188 = vadd.f32 %v186, 1.0
  %v189 = vrcp.pop %v187
  %v190 = vmul.f32 1.0, %v189
  %v191 = vrcp.pop %v188
  %v192 = vmul.f32 1.0, %v191
  %v193 = vmul.f32 %v179, %v190
  %v194 = vmul.f32 %v180, %v192
  %v195 = vlaneseq
  %v196 = vshrl.u32 %v195, 7
  %v197 = vsub.s32 2, %v196
  %v198 = vrot.slane %v56, %v197
  %v199 = vmul.f32 %v159, %v198
  %v200 = vmul.f32 %v163, %v198
  %v201 = vmul.f32 %v161, %v170
  %v202 = vmul.f32 %v165, %v170
  %v203 = vadd.f32 %v199, %v201
  %v204 = vadd.f32 %v200, %v202
  %v205 = vadd.f32 %v203, %v177
  %v206 = vadd.f32 %v204, %v177
  %v207 = vxor.u32 %v205, 2147483648
  %v208 = vxor.u32 %v206, 2147483648
  %v209 = vmul.f32 %v207, 1.442695
  %v210 = vpow.pop %v209
  %v211 = vmul.f32 %v208, 1.442695
  %v212 = vpow.pop %v211
  %v213 = vadd.f32 %v210, 1.0
  %v214 = vadd.f32 %v212, 1.0
  %v215 = vrcp.pop %v213
  %v216 = vmul.f32 1.0, %v215
  %v217 = vrcp.pop %v214
  %v218 = vmul.f32 1.0, %v217
  %v219 = vmul.f32 %v205, %v216
  %v220 = vmul.f32 %v206, %v218
  %223 = vrot.lane.b32.xlu0 %v219, 64
  %v224 = vpop.permute.xlu0 %223
  %225 = vrot.lane.b32.xlu0 %v220, 64
  %v226 = vpop.permute.xlu0 %225
  %v229 = vsel %vm120, %v193, %v224
  %v230 = vsel %vm120, %v194, %v226
  %v231 = vpack.c.bf16 %v230, %v229
  %v248 = vunpack.c.l.b16 %v58
  %v249 = vunpack.c.h.b16 %v58
  %v250 = vunpack.c.l.b16 %v59
  %v251 = vunpack.c.h.b16 %v59
  %v252 = vunpack.c.l.b16 %v60
  %v253 = vunpack.c.h.b16 %v60
  %v254 = vunpack.c.l.b16 %v61
  %v255 = vunpack.c.h.b16 %v61
  %v256 = vunpack.c.l.b16 %v62
  %v257 = vunpack.c.h.b16 %v62
  %v258 = vunpack.c.l.b16 %v63
  %v259 = vunpack.c.h.b16 %v63
  %v260 = vunpack.c.l.b16 %v64
  %v261 = vunpack.c.h.b16 %v64
  %v262 = vunpack.c.l.b16 %v65
  %v263 = vunpack.c.h.b16 %v65
  %v264 = vunpack.c.l.b16 %v66
  %v265 = vunpack.c.h.b16 %v66
  %v266 = vunpack.c.l.b16 %v67
  %v267 = vunpack.c.h.b16 %v67
  %v268 = vunpack.c.l.b16 %v68
  %v269 = vunpack.c.h.b16 %v68
  %v270 = vunpack.c.l.b16 %v69
  %v271 = vunpack.c.h.b16 %v69
  %v272 = vunpack.c.l.b16 %v70
  %v273 = vunpack.c.h.b16 %v70
  %v274 = vunpack.c.l.b16 %v71
  %v275 = vunpack.c.h.b16 %v71
  %v276 = vunpack.c.l.b16 %v72
  %v277 = vunpack.c.h.b16 %v72
  %v278 = vunpack.c.l.b16 %v73
  %v279 = vunpack.c.h.b16 %v73
  %v280 = vpack.c.b16 %v250, %v248
  %v281 = vpack.c.b16 %v251, %v249
  %v282 = vpack.c.b16 %v254, %v252
  %v283 = vpack.c.b16 %v255, %v253
  %v284 = vpack.c.b16 %v258, %v256
  %v285 = vpack.c.b16 %v259, %v257
  %v286 = vpack.c.b16 %v262, %v260
  %v287 = vpack.c.b16 %v263, %v261
  %v288 = vpack.c.b16 %v266, %v264
  %v289 = vpack.c.b16 %v267, %v265
  %v290 = vpack.c.b16 %v270, %v268
  %v291 = vpack.c.b16 %v271, %v269
  %v292 = vpack.c.b16 %v274, %v272
  %v293 = vpack.c.b16 %v275, %v273
  %v294 = vpack.c.b16 %v278, %v276
  %v295 = vpack.c.b16 %v279, %v277
  %312 = vmatprep.subr.bf16.mxu0 %v295
  %313 = vmatpush1.bf16.msra.mxu0 %v294
  %314 = vmatprep.subr.bf16.mxu0 %v293
  %315 = vmatpush1.bf16.msra.mxu0 %v292
  %316 = vmatprep.subr.bf16.mxu0 %v291
  %317 = vmatpush1.bf16.msra.mxu0 %v290
  %318 = vmatprep.subr.bf16.mxu0 %v289
  %319 = vmatpush1.bf16.msra.mxu0 %v288
  %320 = vmatprep.subr.bf16.mxu0 %v287
  %321 = vmatpush1.bf16.msra.mxu0 %v286
  %322 = vmatprep.subr.bf16.mxu0 %v285
  %323 = vmatpush1.bf16.msra.mxu0 %v284
  %324 = vmatprep.subr.bf16.mxu0 %v283
  %325 = vmatpush1.bf16.msra.mxu0 %v282
  %326 = vmatprep.subr.bf16.mxu0 %v281
  %327 = vmatpush1.bf16.msra.mxu0 %v280
  %328 = vmatprep.subr.bf16.mxu0 0
  %329 = vmatpush2.bf16.msra.mxu0 0
  %330 = vmatprep.subr.bf16.mxu0 0
  %331 = vmatpush2.bf16.msra.mxu0 0
  %332 = vmatprep.subr.bf16.mxu0 0
  %333 = vmatpush2.bf16.msra.mxu0 0
  %334 = vmatprep.subr.bf16.mxu0 0
  %335 = vmatpush2.bf16.msra.mxu0 0
  %336 = vmatprep.subr.bf16.mxu0 0
  %337 = vmatpush2.bf16.msra.mxu0 0
  %338 = vmatprep.subr.bf16.mxu0 0
  %339 = vmatpush2.bf16.msra.mxu0 0
  %340 = vmatprep.subr.bf16.mxu0 0
  %341 = vmatpush2.bf16.msra.mxu0 0
  %342 = vmatprep.subr.bf16.mxu0 0
  %343 = vmatpush2.bf16.msra.mxu0 0
  %344 = vmatprep.mubr.bf16.mxu0 0
  %345 = vmatmul.mubr.bf16.gmra.mxu0 %v231
  %v346 = vpop.f32.mrf.mxu0
  %v347 = vadd.f32 0.0, %v346
  %v348 = vpop.f32.mrf.mxu0
  %v349 = vadd.f32 0.0, %v348
  %v350 = vpop.f32.mrf.mxu0
  %v351 = vadd.f32 0.0, %v350
  %v352 = vpop.f32.mrf.mxu0
  %v353 = vadd.f32 0.0, %v352
  %354 = vdwg.mxu0
  %v356 = vlaneseq
  %v357 = vshrl.u32 %v356, 7
  %v358 = vsub.s32 0, %v357
  %v359 = vrot.slane %v74, %v358
  %v361 = vadd.f32 %v347, %v359
  %v362 = vadd.f32 %v351, %v359
  %vm363 = vcmp.gt.f32.partialorder %v361, 20.0
  %vm364 = vcmp.gt.f32.partialorder %v362, 20.0
  %v365 = vmin.f32 %v361, 20.0
  %v366 = vmin.f32 %v362, 20.0
  %v367 = vmul.f32 %v365, 1.442695
  %v368 = vpow.pop %v367
  %v369 = vmul.f32 %v366, 1.442695
  %v370 = vpow.pop %v369
  %v371 = vadd.f32 %v368, 1.0
  %v372 = vlog2.pop %v371
  %v373 = vmul.f32 %v372, 0.6931472
  %v374 = vmul.f32 -0.5, %v368
  %v375 = vadd.f32 %v374, 1.0
  %v376 = vmul.f32 %v375, %v368
  %v377 = vand.u32 2147483647, %v368
  %vm378 = vcmp.lt.f32.partialorder %v377, 0.0004427343
  %v379 = vsel %vm378, %v376, %v373
  %v380 = vadd.f32 %v370, 1.0
  %v381 = vlog2.pop %v380
  %v382 = vmul.f32 %v381, 0.6931472
  %v383 = vmul.f32 -0.5, %v370
  %v384 = vadd.f32 %v383, 1.0
  %v385 = vmul.f32 %v384, %v370
  %v386 = vand.u32 2147483647, %v370
  %vm387 = vcmp.lt.f32.partialorder %v386, 0.0004427343
  %v388 = vsel %vm387, %v385, %v382
  %v389 = vsel %vm363, %v361, %v379
  %v390 = vsel %vm364, %v362, %v388
  %393 = vrot.lane.b32.xlu0 %v389, 64
  %v394 = vpop.permute.xlu0 %393
  %395 = vrot.lane.b32.xlu0 %v390, 64
  %v396 = vpop.permute.xlu0 %395
  %v399 = vsel %vm120, %v389, %v394
  %v400 = vsel %vm120, %v390, %v396
  %v401 = vmul.f32 %v389, %v193
  %v402 = vmul.f32 %v390, %v194
  %405 = vrot.lane.b32.xlu0 %v401, 64
  %v406 = vpop.permute.xlu0 %405
  %407 = vrot.lane.b32.xlu0 %v402, 64
  %v408 = vpop.permute.xlu0 %407
  %v411 = vsel %vm120, %v401, %v406
  %v412 = vsel %vm120, %v402, %v408
  %v413 = vlaneseq
  %v414 = vshrl.u32 %v413, 7
  %v415 = vsub.s32 0, %v414
  %v416 = vrot.slane %v347, %v415
  %s418 = sor.u32 256, 64
  %419 = vbcast.lane.b32.xlu0 %v416, %s418
  %v420 = vpop.permute.xlu0 %419
  %v421 = vlaneseq
  %v422 = vshrl.u32 %v421, 7
  %v423 = vsub.s32 1, %v422
  %v424 = vrot.slane %v347, %v423
  %s426 = sor.u32 256, 64
  %427 = vbcast.lane.b32.xlu0 %v424, %s426
  %v428 = vpop.permute.xlu0 %427
  %v429 = vlaneseq
  %v430 = vshrl.u32 %v429, 7
  %v431 = vsub.s32 2, %v430
  %v432 = vrot.slane %v347, %v431
  %s434 = sor.u32 256, 64
  %435 = vbcast.lane.b32.xlu0 %v432, %s434
  %v436 = vpop.permute.xlu0 %435
  %v437 = vlaneseq
  %v438 = vshrl.u32 %v437, 7
  %v439 = vsub.s32 3, %v438
  %v440 = vrot.slane %v347, %v439
  %s442 = sor.u32 256, 64
  %443 = vbcast.lane.b32.xlu0 %v440, %s442
  %v444 = vpop.permute.xlu0 %443
  %v445 = vlaneseq
  %v446 = vshrl.u32 %v445, 7
  %v447 = vsub.s32 4, %v446
  %v448 = vrot.slane %v347, %v447
  %s450 = sor.u32 256, 64
  %451 = vbcast.lane.b32.xlu0 %v448, %s450
  %v452 = vpop.permute.xlu0 %451
  %v453 = vlaneseq
  %v454 = vshrl.u32 %v453, 7
  %v455 = vsub.s32 5, %v454
  %v456 = vrot.slane %v347, %v455
  %s458 = sor.u32 256, 64
  %459 = vbcast.lane.b32.xlu0 %v456, %s458
  %v460 = vpop.permute.xlu0 %459
  %v461 = vlaneseq
  %v462 = vshrl.u32 %v461, 7
  %v463 = vsub.s32 6, %v462
  %v464 = vrot.slane %v347, %v463
  %s466 = sor.u32 256, 64
  %467 = vbcast.lane.b32.xlu0 %v464, %s466
  %v468 = vpop.permute.xlu0 %467
  %v469 = vlaneseq
  %v470 = vshrl.u32 %v469, 7
  %v471 = vsub.s32 7, %v470
  %v472 = vrot.slane %v347, %v471
  %s474 = sor.u32 256, 64
  %475 = vbcast.lane.b32.xlu0 %v472, %s474
  %v476 = vpop.permute.xlu0 %475
  %v477 = vlaneseq
  %v478 = vshrl.u32 %v477, 7
  %v479 = vsub.s32 0, %v478
  %v480 = vrot.slane %v351, %v479
  %s482 = sor.u32 256, 64
  %483 = vbcast.lane.b32.xlu0 %v480, %s482
  %v484 = vpop.permute.xlu0 %483
  %v485 = vlaneseq
  %v486 = vshrl.u32 %v485, 7
  %v487 = vsub.s32 1, %v486
  %v488 = vrot.slane %v351, %v487
  %s490 = sor.u32 256, 64
  %491 = vbcast.lane.b32.xlu0 %v488, %s490
  %v492 = vpop.permute.xlu0 %491
  %v493 = vlaneseq
  %v494 = vshrl.u32 %v493, 7
  %v495 = vsub.s32 2, %v494
  %v496 = vrot.slane %v351, %v495
  %s498 = sor.u32 256, 64
  %499 = vbcast.lane.b32.xlu0 %v496, %s498
  %v500 = vpop.permute.xlu0 %499
  %v501 = vlaneseq
  %v502 = vshrl.u32 %v501, 7
  %v503 = vsub.s32 3, %v502
  %v504 = vrot.slane %v351, %v503
  %s506 = sor.u32 256, 64
  %507 = vbcast.lane.b32.xlu0 %v504, %s506
  %v508 = vpop.permute.xlu0 %507
  %v509 = vlaneseq
  %v510 = vshrl.u32 %v509, 7
  %v511 = vsub.s32 4, %v510
  %v512 = vrot.slane %v351, %v511
  %s514 = sor.u32 256, 64
  %515 = vbcast.lane.b32.xlu0 %v512, %s514
  %v516 = vpop.permute.xlu0 %515
  %v517 = vlaneseq
  %v518 = vshrl.u32 %v517, 7
  %v519 = vsub.s32 5, %v518
  %v520 = vrot.slane %v351, %v519
  %s522 = sor.u32 256, 64
  %523 = vbcast.lane.b32.xlu0 %v520, %s522
  %v524 = vpop.permute.xlu0 %523
  %v525 = vlaneseq
  %v526 = vshrl.u32 %v525, 7
  %v527 = vsub.s32 6, %v526
  %v528 = vrot.slane %v351, %v527
  %s530 = sor.u32 256, 64
  %531 = vbcast.lane.b32.xlu0 %v528, %s530
  %v532 = vpop.permute.xlu0 %531
  %v533 = vlaneseq
  %v534 = vshrl.u32 %v533, 7
  %v535 = vsub.s32 7, %v534
  %v536 = vrot.slane %v351, %v535
  %s538 = sor.u32 256, 64
  %539 = vbcast.lane.b32.xlu0 %v536, %s538
  %v540 = vpop.permute.xlu0 %539
  %s542 = sor.u32 256, 72
  %543 = vbcast.lane.b32.xlu0 %v416, %s542
  %v544 = vpop.permute.xlu0 %543
  %s546 = sor.u32 256, 72
  %547 = vbcast.lane.b32.xlu0 %v424, %s546
  %v548 = vpop.permute.xlu0 %547
  %s550 = sor.u32 256, 72
  %551 = vbcast.lane.b32.xlu0 %v432, %s550
  %v552 = vpop.permute.xlu0 %551
  %s554 = sor.u32 256, 72
  %555 = vbcast.lane.b32.xlu0 %v440, %s554
  %v556 = vpop.permute.xlu0 %555
  %s558 = sor.u32 256, 72
  %559 = vbcast.lane.b32.xlu0 %v448, %s558
  %v560 = vpop.permute.xlu0 %559
  %s562 = sor.u32 256, 72
  %563 = vbcast.lane.b32.xlu0 %v456, %s562
  %v564 = vpop.permute.xlu0 %563
  %s566 = sor.u32 256, 72
  %567 = vbcast.lane.b32.xlu0 %v464, %s566
  %v568 = vpop.permute.xlu0 %567
  %s570 = sor.u32 256, 72
  %571 = vbcast.lane.b32.xlu0 %v472, %s570
  %v572 = vpop.permute.xlu0 %571
  %s574 = sor.u32 256, 72
  %575 = vbcast.lane.b32.xlu0 %v480, %s574
  %v576 = vpop.permute.xlu0 %575
  %s578 = sor.u32 256, 72
  %579 = vbcast.lane.b32.xlu0 %v488, %s578
  %v580 = vpop.permute.xlu0 %579
  %s582 = sor.u32 256, 72
  %583 = vbcast.lane.b32.xlu0 %v496, %s582
  %v584 = vpop.permute.xlu0 %583
  %s586 = sor.u32 256, 72
  %587 = vbcast.lane.b32.xlu0 %v504, %s586
  %v588 = vpop.permute.xlu0 %587
  %s590 = sor.u32 256, 72
  %591 = vbcast.lane.b32.xlu0 %v512, %s590
  %v592 = vpop.permute.xlu0 %591
  %s594 = sor.u32 256, 72
  %595 = vbcast.lane.b32.xlu0 %v520, %s594
  %v596 = vpop.permute.xlu0 %595
  %s598 = sor.u32 256, 72
  %599 = vbcast.lane.b32.xlu0 %v528, %s598
  %v600 = vpop.permute.xlu0 %599
  %s602 = sor.u32 256, 72
  %603 = vbcast.lane.b32.xlu0 %v536, %s602
  %v604 = vpop.permute.xlu0 %603
  %v605 = vsel %vm120, %v420, %v544
  %v606 = vsel %vm120, %v428, %v548
  %v607 = vsel %vm120, %v436, %v552
  %v608 = vsel %vm120, %v444, %v556
  %v609 = vsel %vm120, %v452, %v560
  %v610 = vsel %vm120, %v460, %v564
  %v611 = vsel %vm120, %v468, %v568
  %v612 = vsel %vm120, %v476, %v572
  %v613 = vsel %vm120, %v484, %v576
  %v614 = vsel %vm120, %v492, %v580
  %v615 = vsel %vm120, %v500, %v584
  %v616 = vsel %vm120, %v508, %v588
  %v617 = vsel %vm120, %v516, %v592
  %v618 = vsel %vm120, %v524, %v596
  %v619 = vsel %vm120, %v532, %v600
  %v620 = vsel %vm120, %v540, %v604
  %s622 = sor.u32 256, 80
  %623 = vbcast.lane.b32.xlu0 %v416, %s622
  %v624 = vpop.permute.xlu0 %623
  %s626 = sor.u32 256, 80
  %627 = vbcast.lane.b32.xlu0 %v424, %s626
  %v628 = vpop.permute.xlu0 %627
  %s630 = sor.u32 256, 80
  %631 = vbcast.lane.b32.xlu0 %v432, %s630
  %v632 = vpop.permute.xlu0 %631
  %s634 = sor.u32 256, 80
  %635 = vbcast.lane.b32.xlu0 %v440, %s634
  %v636 = vpop.permute.xlu0 %635
  %s638 = sor.u32 256, 80
  %639 = vbcast.lane.b32.xlu0 %v448, %s638
  %v640 = vpop.permute.xlu0 %639
  %s642 = sor.u32 256, 80
  %643 = vbcast.lane.b32.xlu0 %v456, %s642
  %v644 = vpop.permute.xlu0 %643
  %s646 = sor.u32 256, 80
  %647 = vbcast.lane.b32.xlu0 %v464, %s646
  %v648 = vpop.permute.xlu0 %647
  %s650 = sor.u32 256, 80
  %651 = vbcast.lane.b32.xlu0 %v472, %s650
  %v652 = vpop.permute.xlu0 %651
  %s654 = sor.u32 256, 80
  %655 = vbcast.lane.b32.xlu0 %v480, %s654
  %v656 = vpop.permute.xlu0 %655
  %s658 = sor.u32 256, 80
  %659 = vbcast.lane.b32.xlu0 %v488, %s658
  %v660 = vpop.permute.xlu0 %659
  %s662 = sor.u32 256, 80
  %663 = vbcast.lane.b32.xlu0 %v496, %s662
  %v664 = vpop.permute.xlu0 %663
  %s666 = sor.u32 256, 80
  %667 = vbcast.lane.b32.xlu0 %v504, %s666
  %v668 = vpop.permute.xlu0 %667
  %s670 = sor.u32 256, 80
  %671 = vbcast.lane.b32.xlu0 %v512, %s670
  %v672 = vpop.permute.xlu0 %671
  %s674 = sor.u32 256, 80
  %675 = vbcast.lane.b32.xlu0 %v520, %s674
  %v676 = vpop.permute.xlu0 %675
  %s678 = sor.u32 256, 80
  %679 = vbcast.lane.b32.xlu0 %v528, %s678
  %v680 = vpop.permute.xlu0 %679
  %s682 = sor.u32 256, 80
  %683 = vbcast.lane.b32.xlu0 %v536, %s682
  %v684 = vpop.permute.xlu0 %683
  %s686 = sor.u32 256, 88
  %687 = vbcast.lane.b32.xlu0 %v416, %s686
  %v688 = vpop.permute.xlu0 %687
  %s690 = sor.u32 256, 88
  %691 = vbcast.lane.b32.xlu0 %v424, %s690
  %v692 = vpop.permute.xlu0 %691
  %s694 = sor.u32 256, 88
  %695 = vbcast.lane.b32.xlu0 %v432, %s694
  %v696 = vpop.permute.xlu0 %695
  %s698 = sor.u32 256, 88
  %699 = vbcast.lane.b32.xlu0 %v440, %s698
  %v700 = vpop.permute.xlu0 %699
  %s702 = sor.u32 256, 88
  %703 = vbcast.lane.b32.xlu0 %v448, %s702
  %v704 = vpop.permute.xlu0 %703
  %s706 = sor.u32 256, 88
  %707 = vbcast.lane.b32.xlu0 %v456, %s706
  %v708 = vpop.permute.xlu0 %707
  %s710 = sor.u32 256, 88
  %711 = vbcast.lane.b32.xlu0 %v464, %s710
  %v712 = vpop.permute.xlu0 %711
  %s714 = sor.u32 256, 88
  %715 = vbcast.lane.b32.xlu0 %v472, %s714
  %v716 = vpop.permute.xlu0 %715
  %s718 = sor.u32 256, 88
  %719 = vbcast.lane.b32.xlu0 %v480, %s718
  %v720 = vpop.permute.xlu0 %719
  %s722 = sor.u32 256, 88
  %723 = vbcast.lane.b32.xlu0 %v488, %s722
  %v724 = vpop.permute.xlu0 %723
  %s726 = sor.u32 256, 88
  %727 = vbcast.lane.b32.xlu0 %v496, %s726
  %v728 = vpop.permute.xlu0 %727
  %s730 = sor.u32 256, 88
  %731 = vbcast.lane.b32.xlu0 %v504, %s730
  %v732 = vpop.permute.xlu0 %731
  %s734 = sor.u32 256, 88
  %735 = vbcast.lane.b32.xlu0 %v512, %s734
  %v736 = vpop.permute.xlu0 %735
  %s738 = sor.u32 256, 88
  %739 = vbcast.lane.b32.xlu0 %v520, %s738
  %v740 = vpop.permute.xlu0 %739
  %s742 = sor.u32 256, 88
  %743 = vbcast.lane.b32.xlu0 %v528, %s742
  %v744 = vpop.permute.xlu0 %743
  %s746 = sor.u32 256, 88
  %747 = vbcast.lane.b32.xlu0 %v536, %s746
  %v748 = vpop.permute.xlu0 %747
  %v749 = vsel %vm120, %v624, %v688
  %v750 = vsel %vm120, %v628, %v692
  %v751 = vsel %vm120, %v632, %v696
  %v752 = vsel %vm120, %v636, %v700
  %v753 = vsel %vm120, %v640, %v704
  %v754 = vsel %vm120, %v644, %v708
  %v755 = vsel %vm120, %v648, %v712
  %v756 = vsel %vm120, %v652, %v716
  %v757 = vsel %vm120, %v656, %v720
  %v758 = vsel %vm120, %v660, %v724
  %v759 = vsel %vm120, %v664, %v728
  %v760 = vsel %vm120, %v668, %v732
  %v761 = vsel %vm120, %v672, %v736
  %v762 = vsel %vm120, %v676, %v740
  %v763 = vsel %vm120, %v680, %v744
  %v764 = vsel %vm120, %v684, %v748
  %v767 = vcombine.high %v399, %v399
  %v769 = vunpack.c.l.s4 1966171168
  %v770 = vunpack.c.0.s8 %v769
  %v771 = vlaneseq
  %v772 = vshrl.u32 %v771, 7
  %v773 = vsub.s32 %v770, %v772
  %v774 = vrot.slane %v399, %v773
  %v776 = vunpack.c.l.s4 1966171168
  %v777 = vunpack.c.0.s8 %v776
  %v778 = vlaneseq
  %v779 = vshrl.u32 %v778, 7
  %v780 = vsub.s32 %v777, %v779
  %v781 = vrot.slane %v767, %v780
  %v782 = vcombine.high %v774, %v774
  %v783 = vcombine.high %v781, %v781
  %v785 = vunpack.c.l.s4 1966171168
  %v786 = vunpack.c.0.s8 %v785
  %v787 = vlaneseq
  %v788 = vshrl.u32 %v787, 7
  %v789 = vsub.s32 %v786, %v788
  %v790 = vrot.slane %v774, %v789
  %v792 = vunpack.c.l.s4 1966171168
  %v793 = vunpack.c.0.s8 %v792
  %v794 = vlaneseq
  %v795 = vshrl.u32 %v794, 7
  %v796 = vsub.s32 %v793, %v795
  %v797 = vrot.slane %v781, %v796
  %v799 = vunpack.c.l.s4 1966171168
  %v800 = vunpack.c.0.s8 %v799
  %v801 = vlaneseq
  %v802 = vshrl.u32 %v801, 7
  %v803 = vsub.s32 %v800, %v802
  %v804 = vrot.slane %v782, %v803
  %v806 = vunpack.c.l.s4 1966171168
  %v807 = vunpack.c.0.s8 %v806
  %v808 = vlaneseq
  %v809 = vshrl.u32 %v808, 7
  %v810 = vsub.s32 %v807, %v809
  %v811 = vrot.slane %v783, %v810
  %v812 = vcombine.high %v790, %v790
  %v813 = vcombine.high %v797, %v797
  %v814 = vcombine.high %v804, %v804
  %v815 = vcombine.high %v811, %v811
  %v816 = vcombine.high %v400, %v400
  %v818 = vunpack.c.l.s4 1966171168
  %v819 = vunpack.c.0.s8 %v818
  %v820 = vlaneseq
  %v821 = vshrl.u32 %v820, 7
  %v822 = vsub.s32 %v819, %v821
  %v823 = vrot.slane %v400, %v822
  %v825 = vunpack.c.l.s4 1966171168
  %v826 = vunpack.c.0.s8 %v825
  %v827 = vlaneseq
  %v828 = vshrl.u32 %v827, 7
  %v829 = vsub.s32 %v826, %v828
  %v830 = vrot.slane %v816, %v829
  %v831 = vcombine.high %v823, %v823
  %v832 = vcombine.high %v830, %v830
  %v834 = vunpack.c.l.s4 1966171168
  %v835 = vunpack.c.0.s8 %v834
  %v836 = vlaneseq
  %v837 = vshrl.u32 %v836, 7
  %v838 = vsub.s32 %v835, %v837
  %v839 = vrot.slane %v823, %v838
  %v841 = vunpack.c.l.s4 1966171168
  %v842 = vunpack.c.0.s8 %v841
  %v843 = vlaneseq
  %v844 = vshrl.u32 %v843, 7
  %v845 = vsub.s32 %v842, %v844
  %v846 = vrot.slane %v830, %v845
  %v848 = vunpack.c.l.s4 1966171168
  %v849 = vunpack.c.0.s8 %v848
  %v850 = vlaneseq
  %v851 = vshrl.u32 %v850, 7
  %v852 = vsub.s32 %v849, %v851
  %v853 = vrot.slane %v831, %v852
  %v855 = vunpack.c.l.s4 1966171168
  %v856 = vunpack.c.0.s8 %v855
  %v857 = vlaneseq
  %v858 = vshrl.u32 %v857, 7
  %v859 = vsub.s32 %v856, %v858
  %v860 = vrot.slane %v832, %v859
  %v861 = vcombine.high %v839, %v839
  %v862 = vcombine.high %v846, %v846
  %v863 = vcombine.high %v853, %v853
  %v864 = vcombine.high %v860, %v860
  %v865 = vlaneseq
  %v866 = vshrl.u32 %v865, 7
  %v867 = vsub.s32 0, %v866
  %v868 = vrot.slane %v790, %v867
  %v869 = vlaneseq
  %v870 = vshrl.u32 %v869, 7
  %v871 = vsub.s32 0, %v870
  %v872 = vrot.slane %v804, %v871
  %v873 = vlaneseq
  %v874 = vshrl.u32 %v873, 7
  %v875 = vsub.s32 0, %v874
  %v876 = vrot.slane %v812, %v875
  %v877 = vlaneseq
  %v878 = vshrl.u32 %v877, 7
  %v879 = vsub.s32 0, %v878
  %v880 = vrot.slane %v814, %v879
  %v881 = vlaneseq
  %v882 = vshrl.u32 %v881, 7
  %v883 = vsub.s32 0, %v882
  %v884 = vrot.slane %v797, %v883
  %v885 = vlaneseq
  %v886 = vshrl.u32 %v885, 7
  %v887 = vsub.s32 0, %v886
  %v888 = vrot.slane %v811, %v887
  %v889 = vlaneseq
  %v890 = vshrl.u32 %v889, 7
  %v891 = vsub.s32 0, %v890
  %v892 = vrot.slane %v813, %v891
  %v893 = vlaneseq
  %v894 = vshrl.u32 %v893, 7
  %v895 = vsub.s32 0, %v894
  %v896 = vrot.slane %v815, %v895
  %v897 = vlaneseq
  %v898 = vshrl.u32 %v897, 7
  %v899 = vsub.s32 0, %v898
  %v900 = vrot.slane %v839, %v899
  %v901 = vlaneseq
  %v902 = vshrl.u32 %v901, 7
  %v903 = vsub.s32 0, %v902
  %v904 = vrot.slane %v853, %v903
  %v905 = vlaneseq
  %v906 = vshrl.u32 %v905, 7
  %v907 = vsub.s32 0, %v906
  %v908 = vrot.slane %v861, %v907
  %v909 = vlaneseq
  %v910 = vshrl.u32 %v909, 7
  %v911 = vsub.s32 0, %v910
  %v912 = vrot.slane %v863, %v911
  %v913 = vlaneseq
  %v914 = vshrl.u32 %v913, 7
  %v915 = vsub.s32 0, %v914
  %v916 = vrot.slane %v846, %v915
  %v917 = vlaneseq
  %v918 = vshrl.u32 %v917, 7
  %v919 = vsub.s32 0, %v918
  %v920 = vrot.slane %v860, %v919
  %v921 = vlaneseq
  %v922 = vshrl.u32 %v921, 7
  %v923 = vsub.s32 0, %v922
  %v924 = vrot.slane %v862, %v923
  %v925 = vlaneseq
  %v926 = vshrl.u32 %v925, 7
  %v927 = vsub.s32 0, %v926
  %v928 = vrot.slane %v864, %v927
  %v945 = vmul.f32 %v868, %v75
  %v946 = vmul.f32 %v872, %v75
  %v947 = vmul.f32 %v876, %v75
  %v948 = vmul.f32 %v880, %v75
  %v949 = vmul.f32 %v884, %v75
  %v950 = vmul.f32 %v888, %v75
  %v951 = vmul.f32 %v892, %v75
  %v952 = vmul.f32 %v896, %v75
  %v953 = vmul.f32 %v900, %v75
  %v954 = vmul.f32 %v904, %v75
  %v955 = vmul.f32 %v908, %v75
  %v956 = vmul.f32 %v912, %v75
  %v957 = vmul.f32 %v916, %v75
  %v958 = vmul.f32 %v920, %v75
  %v959 = vmul.f32 %v924, %v75
  %v960 = vmul.f32 %v928, %v75
  %v961 = vmul.f32 %v945, 1.442695
  %v962 = vpow.pop %v961
  %v963 = vmul.f32 %v946, 1.442695
  %v964 = vpow.pop %v963
  %v965 = vmul.f32 %v947, 1.442695
  %v966 = vpow.pop %v965
  %v967 = vmul.f32 %v948, 1.442695
  %v968 = vpow.pop %v967
  %v969 = vmul.f32 %v949, 1.442695
  %v970 = vpow.pop %v969
  %v971 = vmul.f32 %v950, 1.442695
  %v972 = vpow.pop %v971
  %v973 = vmul.f32 %v951, 1.442695
  %v974 = vpow.pop %v973
  %v975 = vmul.f32 %v952, 1.442695
  %v976 = vpow.pop %v975
  %v977 = vmul.f32 %v953, 1.442695
  %v978 = vpow.pop %v977
  %v979 = vmul.f32 %v954, 1.442695
  %v980 = vpow.pop %v979
  %v981 = vmul.f32 %v955, 1.442695
  %v982 = vpow.pop %v981
  %v983 = vmul.f32 %v956, 1.442695
  %v984 = vpow.pop %v983
  %v985 = vmul.f32 %v957, 1.442695
  %v986 = vpow.pop %v985
  %v987 = vmul.f32 %v958, 1.442695
  %v988 = vpow.pop %v987
  %v989 = vmul.f32 %v959, 1.442695
  %v990 = vpow.pop %v989
  %v991 = vmul.f32 %v960, 1.442695
  %v992 = vpow.pop %v991
  %v993 = vmul.f32 %v962, 0.0
  %v994 = vmul.f32 %v964, 0.0
  %v995 = vmul.f32 %v966, 0.0
  %v996 = vmul.f32 %v968, 0.0
  %v997 = vmul.f32 %v970, 0.0
  %v998 = vmul.f32 %v972, 0.0
  %v999 = vmul.f32 %v974, 0.0
  %v1000 = vmul.f32 %v976, 0.0
  %v1001 = vmul.f32 %v978, 0.0
  %v1002 = vmul.f32 %v980, 0.0
  %v1003 = vmul.f32 %v982, 0.0
  %v1004 = vmul.f32 %v984, 0.0
  %v1005 = vmul.f32 %v986, 0.0
  %v1006 = vmul.f32 %v988, 0.0
  %v1007 = vmul.f32 %v990, 0.0
  %v1008 = vmul.f32 %v992, 0.0
  %v1011 = vcombine.high %v411, %v411
  %v1013 = vunpack.c.l.s4 1966171168
  %v1014 = vunpack.c.0.s8 %v1013
  %v1015 = vlaneseq
  %v1016 = vshrl.u32 %v1015, 7
  %v1017 = vsub.s32 %v1014, %v1016
  %v1018 = vrot.slane %v411, %v1017
  %v1020 = vunpack.c.l.s4 1966171168
  %v1021 = vunpack.c.0.s8 %v1020
  %v1022 = vlaneseq
  %v1023 = vshrl.u32 %v1022, 7
  %v1024 = vsub.s32 %v1021, %v1023
  %v1025 = vrot.slane %v1011, %v1024
  %v1026 = vcombine.high %v1018, %v1018
  %v1027 = vcombine.high %v1025, %v1025
  %v1029 = vunpack.c.l.s4 1966171168
  %v1030 = vunpack.c.0.s8 %v1029
  %v1031 = vlaneseq
  %v1032 = vshrl.u32 %v1031, 7
  %v1033 = vsub.s32 %v1030, %v1032
  %v1034 = vrot.slane %v1018, %v1033
  %v1036 = vunpack.c.l.s4 1966171168
  %v1037 = vunpack.c.0.s8 %v1036
  %v1038 = vlaneseq
  %v1039 = vshrl.u32 %v1038, 7
  %v1040 = vsub.s32 %v1037, %v1039
  %v1041 = vrot.slane %v1025, %v1040
  %v1043 = vunpack.c.l.s4 1966171168
  %v1044 = vunpack.c.0.s8 %v1043
  %v1045 = vlaneseq
  %v1046 = vshrl.u32 %v1045, 7
  %v1047 = vsub.s32 %v1044, %v1046
  %v1048 = vrot.slane %v1026, %v1047
  %v1050 = vunpack.c.l.s4 1966171168
  %v1051 = vunpack.c.0.s8 %v1050
  %v1052 = vlaneseq
  %v1053 = vshrl.u32 %v1052, 7
  %v1054 = vsub.s32 %v1051, %v1053
  %v1055 = vrot.slane %v1027, %v1054
  %v1056 = vcombine.high %v1034, %v1034
  %v1057 = vcombine.high %v1041, %v1041
  %v1058 = vcombine.high %v1048, %v1048
  %v1059 = vcombine.high %v1055, %v1055
  %v1060 = vcombine.high %v412, %v412
  %v1062 = vunpack.c.l.s4 1966171168
  %v1063 = vunpack.c.0.s8 %v1062
  %v1064 = vlaneseq
  %v1065 = vshrl.u32 %v1064, 7
  %v1066 = vsub.s32 %v1063, %v1065
  %v1067 = vrot.slane %v412, %v1066
  %v1069 = vunpack.c.l.s4 1966171168
  %v1070 = vunpack.c.0.s8 %v1069
  %v1071 = vlaneseq
  %v1072 = vshrl.u32 %v1071, 7
  %v1073 = vsub.s32 %v1070, %v1072
  %v1074 = vrot.slane %v1060, %v1073
  %v1075 = vcombine.high %v1067, %v1067
  %v1076 = vcombine.high %v1074, %v1074
  %v1078 = vunpack.c.l.s4 1966171168
  %v1079 = vunpack.c.0.s8 %v1078
  %v1080 = vlaneseq
  %v1081 = vshrl.u32 %v1080, 7
  %v1082 = vsub.s32 %v1079, %v1081
  %v1083 = vrot.slane %v1067, %v1082
  %v1085 = vunpack.c.l.s4 1966171168
  %v1086 = vunpack.c.0.s8 %v1085
  %v1087 = vlaneseq
  %v1088 = vshrl.u32 %v1087, 7
  %v1089 = vsub.s32 %v1086, %v1088
  %v1090 = vrot.slane %v1074, %v1089
  %v1092 = vunpack.c.l.s4 1966171168
  %v1093 = vunpack.c.0.s8 %v1092
  %v1094 = vlaneseq
  %v1095 = vshrl.u32 %v1094, 7
  %v1096 = vsub.s32 %v1093, %v1095
  %v1097 = vrot.slane %v1075, %v1096
  %v1099 = vunpack.c.l.s4 1966171168
  %v1100 = vunpack.c.0.s8 %v1099
  %v1101 = vlaneseq
  %v1102 = vshrl.u32 %v1101, 7
  %v1103 = vsub.s32 %v1100, %v1102
  %v1104 = vrot.slane %v1076, %v1103
  %v1105 = vcombine.high %v1083, %v1083
  %v1106 = vcombine.high %v1090, %v1090
  %v1107 = vcombine.high %v1097, %v1097
  %v1108 = vcombine.high %v1104, %v1104
  %v1109 = vlaneseq
  %v1110 = vshrl.u32 %v1109, 7
  %v1111 = vsub.s32 0, %v1110
  %v1112 = vrot.slane %v1034, %v1111
  %v1113 = vlaneseq
  %v1114 = vshrl.u32 %v1113, 7
  %v1115 = vsub.s32 0, %v1114
  %v1116 = vrot.slane %v1048, %v1115
  %v1117 = vlaneseq
  %v1118 = vshrl.u32 %v1117, 7
  %v1119 = vsub.s32 0, %v1118
  %v1120 = vrot.slane %v1056, %v1119
  %v1121 = vlaneseq
  %v1122 = vshrl.u32 %v1121, 7
  %v1123 = vsub.s32 0, %v1122
  %v1124 = vrot.slane %v1058, %v1123
  %v1125 = vlaneseq
  %v1126 = vshrl.u32 %v1125, 7
  %v1127 = vsub.s32 0, %v1126
  %v1128 = vrot.slane %v1041, %v1127
  %v1129 = vlaneseq
  %v1130 = vshrl.u32 %v1129, 7
  %v1131 = vsub.s32 0, %v1130
  %v1132 = vrot.slane %v1055, %v1131
  %v1133 = vlaneseq
  %v1134 = vshrl.u32 %v1133, 7
  %v1135 = vsub.s32 0, %v1134
  %v1136 = vrot.slane %v1057, %v1135
  %v1137 = vlaneseq
  %v1138 = vshrl.u32 %v1137, 7
  %v1139 = vsub.s32 0, %v1138
  %v1140 = vrot.slane %v1059, %v1139
  %v1141 = vlaneseq
  %v1142 = vshrl.u32 %v1141, 7
  %v1143 = vsub.s32 0, %v1142
  %v1144 = vrot.slane %v1083, %v1143
  %v1145 = vlaneseq
  %v1146 = vshrl.u32 %v1145, 7
  %v1147 = vsub.s32 0, %v1146
  %v1148 = vrot.slane %v1097, %v1147
  %v1149 = vlaneseq
  %v1150 = vshrl.u32 %v1149, 7
  %v1151 = vsub.s32 0, %v1150
  %v1152 = vrot.slane %v1105, %v1151
  %v1153 = vlaneseq
  %v1154 = vshrl.u32 %v1153, 7
  %v1155 = vsub.s32 0, %v1154
  %v1156 = vrot.slane %v1107, %v1155
  %v1157 = vlaneseq
  %v1158 = vshrl.u32 %v1157, 7
  %v1159 = vsub.s32 0, %v1158
  %v1160 = vrot.slane %v1090, %v1159
  %v1161 = vlaneseq
  %v1162 = vshrl.u32 %v1161, 7
  %v1163 = vsub.s32 0, %v1162
  %v1164 = vrot.slane %v1104, %v1163
  %v1165 = vlaneseq
  %v1166 = vshrl.u32 %v1165, 7
  %v1167 = vsub.s32 0, %v1166
  %v1168 = vrot.slane %v1106, %v1167
  %v1169 = vlaneseq
  %v1170 = vshrl.u32 %v1169, 7
  %v1171 = vsub.s32 0, %v1170
  %v1172 = vrot.slane %v1108, %v1171
  %v1189 = vmul.f32 %v1112, %v605
  %v1190 = vmul.f32 %v1116, %v606
  %v1191 = vmul.f32 %v1120, %v607
  %v1192 = vmul.f32 %v1124, %v608
  %v1193 = vmul.f32 %v1128, %v609
  %v1194 = vmul.f32 %v1132, %v610
  %v1195 = vmul.f32 %v1136, %v611
  %v1196 = vmul.f32 %v1140, %v612
  %v1197 = vmul.f32 %v1144, %v613
  %v1198 = vmul.f32 %v1148, %v614
  %v1199 = vmul.f32 %v1152, %v615
  %v1200 = vmul.f32 %v1156, %v616
  %v1201 = vmul.f32 %v1160, %v617
  %v1202 = vmul.f32 %v1164, %v618
  %v1203 = vmul.f32 %v1168, %v619
  %v1204 = vmul.f32 %v1172, %v620
  %v1205 = vadd.f32 %v993, %v1189
  %v1206 = vadd.f32 %v994, %v1190
  %v1207 = vadd.f32 %v995, %v1191
  %v1208 = vadd.f32 %v996, %v1192
  %v1209 = vadd.f32 %v997, %v1193
  %v1210 = vadd.f32 %v998, %v1194
  %v1211 = vadd.f32 %v999, %v1195
  %v1212 = vadd.f32 %v1000, %v1196
  %v1213 = vadd.f32 %v1001, %v1197
  %v1214 = vadd.f32 %v1002, %v1198
  %v1215 = vadd.f32 %v1003, %v1199
  %v1216 = vadd.f32 %v1004, %v1200
  %v1217 = vadd.f32 %v1005, %v1201
  %v1218 = vadd.f32 %v1006, %v1202
  %v1219 = vadd.f32 %v1007, %v1203
  %v1220 = vadd.f32 %v1008, %v1204
  %v1221 = vmul.f32 %v1205, %v749
  %v1222 = vmul.f32 %v1206, %v750
  %v1223 = vmul.f32 %v1207, %v751
  %v1224 = vmul.f32 %v1208, %v752
  %v1225 = vmul.f32 %v1209, %v753
  %v1226 = vmul.f32 %v1210, %v754
  %v1227 = vmul.f32 %v1211, %v755
  %v1228 = vmul.f32 %v1212, %v756
  %v1229 = vmul.f32 %v1213, %v757
  %v1230 = vmul.f32 %v1214, %v758
  %v1231 = vmul.f32 %v1215, %v759
  %v1232 = vmul.f32 %v1216, %v760
  %v1233 = vmul.f32 %v1217, %v761
  %v1234 = vmul.f32 %v1218, %v762
  %v1235 = vmul.f32 %v1219, %v763
  %v1236 = vmul.f32 %v1220, %v764
  %v1237 = vrot.slane %v1221, 4
  %v1238 = vadd.f32 %v1221, %v1237
  %v1239 = vrot.slane %v1238, 2
  %v1240 = vadd.f32 %v1238, %v1239
  %v1241 = vrot.slane %v1240, 1
  %v1242 = vadd.f32 %v1240, %v1241
  %v1243 = vrot.slane %v1222, 4
  %v1244 = vadd.f32 %v1222, %v1243
  %v1245 = vrot.slane %v1244, 2
  %v1246 = vadd.f32 %v1244, %v1245
  %v1247 = vrot.slane %v1246, 1
  %v1248 = vadd.f32 %v1246, %v1247
  %v1249 = vrot.slane %v1223, 4
  %v1250 = vadd.f32 %v1223, %v1249
  %v1251 = vrot.slane %v1250, 2
  %v1252 = vadd.f32 %v1250, %v1251
  %v1253 = vrot.slane %v1252, 1
  %v1254 = vadd.f32 %v1252, %v1253
  %v1255 = vrot.slane %v1224, 4
  %v1256 = vadd.f32 %v1224, %v1255
  %v1257 = vrot.slane %v1256, 2
  %v1258 = vadd.f32 %v1256, %v1257
  %v1259 = vrot.slane %v1258, 1
  %v1260 = vadd.f32 %v1258, %v1259
  %v1261 = vrot.slane %v1225, 4
  %v1262 = vadd.f32 %v1225, %v1261
  %v1263 = vrot.slane %v1262, 2
  %v1264 = vadd.f32 %v1262, %v1263
  %v1265 = vrot.slane %v1264, 1
  %v1266 = vadd.f32 %v1264, %v1265
  %v1267 = vrot.slane %v1226, 4
  %v1268 = vadd.f32 %v1226, %v1267
  %v1269 = vrot.slane %v1268, 2
  %v1270 = vadd.f32 %v1268, %v1269
  %v1271 = vrot.slane %v1270, 1
  %v1272 = vadd.f32 %v1270, %v1271
  %v1273 = vrot.slane %v1227, 4
  %v1274 = vadd.f32 %v1227, %v1273
  %v1275 = vrot.slane %v1274, 2
  %v1276 = vadd.f32 %v1274, %v1275
  %v1277 = vrot.slane %v1276, 1
  %v1278 = vadd.f32 %v1276, %v1277
  %v1279 = vrot.slane %v1228, 4
  %v1280 = vadd.f32 %v1228, %v1279
  %v1281 = vrot.slane %v1280, 2
  %v1282 = vadd.f32 %v1280, %v1281
  %v1283 = vrot.slane %v1282, 1
  %v1284 = vadd.f32 %v1282, %v1283
  %v1285 = vrot.slane %v1229, 4
  %v1286 = vadd.f32 %v1229, %v1285
  %v1287 = vrot.slane %v1286, 2
  %v1288 = vadd.f32 %v1286, %v1287
  %v1289 = vrot.slane %v1288, 1
  %v1290 = vadd.f32 %v1288, %v1289
  %v1291 = vrot.slane %v1230, 4
  %v1292 = vadd.f32 %v1230, %v1291
  %v1293 = vrot.slane %v1292, 2
  %v1294 = vadd.f32 %v1292, %v1293
  %v1295 = vrot.slane %v1294, 1
  %v1296 = vadd.f32 %v1294, %v1295
  %v1297 = vrot.slane %v1231, 4
  %v1298 = vadd.f32 %v1231, %v1297
  %v1299 = vrot.slane %v1298, 2
  %v1300 = vadd.f32 %v1298, %v1299
  %v1301 = vrot.slane %v1300, 1
  %v1302 = vadd.f32 %v1300, %v1301
  %v1303 = vrot.slane %v1232, 4
  %v1304 = vadd.f32 %v1232, %v1303
  %v1305 = vrot.slane %v1304, 2
  %v1306 = vadd.f32 %v1304, %v1305
  %v1307 = vrot.slane %v1306, 1
  %v1308 = vadd.f32 %v1306, %v1307
  %v1309 = vrot.slane %v1233, 4
  %v1310 = vadd.f32 %v1233, %v1309
  %v1311 = vrot.slane %v1310, 2
  %v1312 = vadd.f32 %v1310, %v1311
  %v1313 = vrot.slane %v1312, 1
  %v1314 = vadd.f32 %v1312, %v1313
  %v1315 = vrot.slane %v1234, 4
  %v1316 = vadd.f32 %v1234, %v1315
  %v1317 = vrot.slane %v1316, 2
  %v1318 = vadd.f32 %v1316, %v1317
  %v1319 = vrot.slane %v1318, 1
  %v1320 = vadd.f32 %v1318, %v1319
  %v1321 = vrot.slane %v1235, 4
  %v1322 = vadd.f32 %v1235, %v1321
  %v1323 = vrot.slane %v1322, 2
  %v1324 = vadd.f32 %v1322, %v1323
  %v1325 = vrot.slane %v1324, 1
  %v1326 = vadd.f32 %v1324, %v1325
  %v1327 = vrot.slane %v1236, 4
  %v1328 = vadd.f32 %v1236, %v1327
  %v1329 = vrot.slane %v1328, 2
  %v1330 = vadd.f32 %v1328, %v1329
  %v1331 = vrot.slane %v1330, 1
  %v1332 = vadd.f32 %v1330, %v1331
  %1349 = vrot.lane.b32.xlu0 %v1242, 64
  %v1350 = vpop.permute.xlu0 %1349
  %1351 = vrot.lane.b32.xlu0 %v1248, 64
  %v1352 = vpop.permute.xlu0 %1351
  %1353 = vrot.lane.b32.xlu0 %v1254, 64
  %v1354 = vpop.permute.xlu0 %1353
  %1355 = vrot.lane.b32.xlu0 %v1260, 64
  %v1356 = vpop.permute.xlu0 %1355
  %1357 = vrot.lane.b32.xlu0 %v1266, 64
  %v1358 = vpop.permute.xlu0 %1357
  %1359 = vrot.lane.b32.xlu0 %v1272, 64
  %v1360 = vpop.permute.xlu0 %1359
  %1361 = vrot.lane.b32.xlu0 %v1278, 64
  %v1362 = vpop.permute.xlu0 %1361
  %1363 = vrot.lane.b32.xlu0 %v1284, 64
  %v1364 = vpop.permute.xlu0 %1363
  %1365 = vrot.lane.b32.xlu0 %v1290, 64
  %v1366 = vpop.permute.xlu0 %1365
  %1367 = vrot.lane.b32.xlu0 %v1296, 64
  %v1368 = vpop.permute.xlu0 %1367
  %1369 = vrot.lane.b32.xlu0 %v1302, 64
  %v1370 = vpop.permute.xlu0 %1369
  %1371 = vrot.lane.b32.xlu0 %v1308, 64
  %v1372 = vpop.permute.xlu0 %1371
  %1373 = vrot.lane.b32.xlu0 %v1314, 64
  %v1374 = vpop.permute.xlu0 %1373
  %1375 = vrot.lane.b32.xlu0 %v1320, 64
  %v1376 = vpop.permute.xlu0 %1375
  %1377 = vrot.lane.b32.xlu0 %v1326, 64
  %v1378 = vpop.permute.xlu0 %1377
  %1379 = vrot.lane.b32.xlu0 %v1332, 64
  %v1380 = vpop.permute.xlu0 %1379
  %v1397 = vadd.f32 %v1242, %v1350
  %v1398 = vadd.f32 %v1248, %v1352
  %v1399 = vadd.f32 %v1254, %v1354
  %v1400 = vadd.f32 %v1260, %v1356
  %v1401 = vadd.f32 %v1266, %v1358
  %v1402 = vadd.f32 %v1272, %v1360
  %v1403 = vadd.f32 %v1278, %v1362
  %v1404 = vadd.f32 %v1284, %v1364
  %v1405 = vadd.f32 %v1290, %v1366
  %v1406 = vadd.f32 %v1296, %v1368
  %v1407 = vadd.f32 %v1302, %v1370
  %v1408 = vadd.f32 %v1308, %v1372
  %v1409 = vadd.f32 %v1314, %v1374
  %v1410 = vadd.f32 %v1320, %v1376
  %v1411 = vadd.f32 %v1326, %v1378
  %v1412 = vadd.f32 %v1332, %v1380
  %v1414 = vlaneseq
  %v1415 = vshrl.u32 %v1414, 7
  %v1416 = vsub.s32 0, %v1415
  %v1417 = vrot.slane %v76, %v1416
  %v1419 = vmul.f32 %v1417, %v193
  %v1420 = vmul.f32 %v1417, %v194
  %v1423 = vrot.slane %v1419, 1
  %v1424 = vrot.slane %v1419, 2
  %v1425 = vrot.slane %v1419, 3
  %v1426 = vrot.slane %v1419, 4
  %v1427 = vrot.slane %v1419, 5
  %v1428 = vrot.slane %v1419, 6
  %v1429 = vrot.slane %v1419, 7
  %v1430 = vrot.slane %v1420, 1
  %v1431 = vrot.slane %v1420, 2
  %v1432 = vrot.slane %v1420, 3
  %v1433 = vrot.slane %v1420, 4
  %v1434 = vrot.slane %v1420, 5
  %v1435 = vrot.slane %v1420, 6
  %v1436 = vrot.slane %v1420, 7
  %v1453 = vadd.f32 %v1397, %v1419
  %v1454 = vadd.f32 %v1398, %v1423
  %v1455 = vadd.f32 %v1399, %v1424
  %v1456 = vadd.f32 %v1400, %v1425
  %v1457 = vadd.f32 %v1401, %v1426
  %v1458 = vadd.f32 %v1402, %v1427
  %v1459 = vadd.f32 %v1403, %v1428
  %v1460 = vadd.f32 %v1404, %v1429
  %v1461 = vadd.f32 %v1405, %v1420
  %v1462 = vadd.f32 %v1406, %v1430
  %v1463 = vadd.f32 %v1407, %v1431
  %v1464 = vadd.f32 %v1408, %v1432
  %v1465 = vadd.f32 %v1409, %v1433
  %v1466 = vadd.f32 %v1410, %v1434
  %v1467 = vadd.f32 %v1411, %v1435
  %v1468 = vadd.f32 %v1412, %v1436
  %v1469 = vxor.u32 %v159, 2147483648
  %v1470 = vxor.u32 %v163, 2147483648
  %v1471 = vmul.f32 %v1469, 1.442695
  %v1472 = vpow.pop %v1471
  %v1473 = vmul.f32 %v1470, 1.442695
  %v1474 = vpow.pop %v1473
  %v1475 = vadd.f32 %v1472, 1.0
  %v1476 = vadd.f32 %v1474, 1.0
  %v1477 = vrcp.pop %v1475
  %v1478 = vmul.f32 1.0, %v1477
  %v1479 = vrcp.pop %v1476
  %v1480 = vmul.f32 1.0, %v1479
  %v1481 = vmul.f32 %v159, %v1478
  %v1482 = vmul.f32 %v163, %v1480
  %v1485 = vrot.slane %v1481, 1
  %v1486 = vrot.slane %v1481, 2
  %v1487 = vrot.slane %v1481, 3
  %v1488 = vrot.slane %v1481, 4
  %v1489 = vrot.slane %v1481, 5
  %v1490 = vrot.slane %v1481, 6
  %v1491 = vrot.slane %v1481, 7
  %v1492 = vrot.slane %v1482, 1
  %v1493 = vrot.slane %v1482, 2
  %v1494 = vrot.slane %v1482, 3
  %v1495 = vrot.slane %v1482, 4
  %v1496 = vrot.slane %v1482, 5
  %v1497 = vrot.slane %v1482, 6
  %v1498 = vrot.slane %v1482, 7
  %1499 = vrot.lane.b32.xlu0 %v1481, 64
  %v1500 = vpop.permute.xlu0 %1499
  %1501 = vrot.lane.b32.xlu0 %v1485, 64
  %v1502 = vpop.permute.xlu0 %1501
  %1503 = vrot.lane.b32.xlu0 %v1486, 64
  %v1504 = vpop.permute.xlu0 %1503
  %1505 = vrot.lane.b32.xlu0 %v1487, 64
  %v1506 = vpop.permute.xlu0 %1505
  %1507 = vrot.lane.b32.xlu0 %v1488, 64
  %v1508 = vpop.permute.xlu0 %1507
  %1509 = vrot.lane.b32.xlu0 %v1489, 64
  %v1510 = vpop.permute.xlu0 %1509
  %1511 = vrot.lane.b32.xlu0 %v1490, 64
  %v1512 = vpop.permute.xlu0 %1511
  %1513 = vrot.lane.b32.xlu0 %v1491, 64
  %v1514 = vpop.permute.xlu0 %1513
  %1515 = vrot.lane.b32.xlu0 %v1482, 64
  %v1516 = vpop.permute.xlu0 %1515
  %1517 = vrot.lane.b32.xlu0 %v1492, 64
  %v1518 = vpop.permute.xlu0 %1517
  %1519 = vrot.lane.b32.xlu0 %v1493, 64
  %v1520 = vpop.permute.xlu0 %1519
  %1521 = vrot.lane.b32.xlu0 %v1494, 64
  %v1522 = vpop.permute.xlu0 %1521
  %1523 = vrot.lane.b32.xlu0 %v1495, 64
  %v1524 = vpop.permute.xlu0 %1523
  %1525 = vrot.lane.b32.xlu0 %v1496, 64
  %v1526 = vpop.permute.xlu0 %1525
  %1527 = vrot.lane.b32.xlu0 %v1497, 64
  %v1528 = vpop.permute.xlu0 %1527
  %1529 = vrot.lane.b32.xlu0 %v1498, 64
  %v1530 = vpop.permute.xlu0 %1529
  %v1547 = vmul.f32 %v1453, %v1500
  %v1548 = vmul.f32 %v1454, %v1502
  %v1549 = vmul.f32 %v1455, %v1504
  %v1550 = vmul.f32 %v1456, %v1506
  %v1551 = vmul.f32 %v1457, %v1508
  %v1552 = vmul.f32 %v1458, %v1510
  %v1553 = vmul.f32 %v1459, %v1512
  %v1554 = vmul.f32 %v1460, %v1514
  %v1555 = vmul.f32 %v1461, %v1516
  %v1556 = vmul.f32 %v1462, %v1518
  %v1557 = vmul.f32 %v1463, %v1520
  %v1558 = vmul.f32 %v1464, %v1522
  %v1559 = vmul.f32 %v1465, %v1524
  %v1560 = vmul.f32 %v1466, %v1526
  %v1561 = vmul.f32 %v1467, %v1528
  %v1562 = vmul.f32 %v1468, %v1530
  %v1563 = vadd.f32 %v349, %v359
  %v1564 = vadd.f32 %v353, %v359
  %vm1565 = vcmp.gt.f32.partialorder %v1563, 20.0
  %vm1566 = vcmp.gt.f32.partialorder %v1564, 20.0
  %v1567 = vmin.f32 %v1563, 20.0
  %v1568 = vmin.f32 %v1564, 20.0
  %v1569 = vmul.f32 %v1567, 1.442695
  %v1570 = vpow.pop %v1569
  %v1571 = vmul.f32 %v1568, 1.442695
  %v1572 = vpow.pop %v1571
  %v1573 = vadd.f32 %v1570, 1.0
  %v1574 = vlog2.pop %v1573
  %v1575 = vmul.f32 %v1574, 0.6931472
  %v1576 = vmul.f32 -0.5, %v1570
  %v1577 = vadd.f32 %v1576, 1.0
  %v1578 = vmul.f32 %v1577, %v1570
  %v1579 = vand.u32 2147483647, %v1570
  %vm1580 = vcmp.lt.f32.partialorder %v1579, 0.0004427343
  %v1581 = vsel %vm1580, %v1578, %v1575
  %v1582 = vadd.f32 %v1572, 1.0
  %v1583 = vlog2.pop %v1582
  %v1584 = vmul.f32 %v1583, 0.6931472
  %v1585 = vmul.f32 -0.5, %v1572
  %v1586 = vadd.f32 %v1585, 1.0
  %v1587 = vmul.f32 %v1586, %v1572
  %v1588 = vand.u32 2147483647, %v1572
  %vm1589 = vcmp.lt.f32.partialorder %v1588, 0.0004427343
  %v1590 = vsel %vm1589, %v1587, %v1584
  %v1591 = vsel %vm1565, %v1563, %v1581
  %v1592 = vsel %vm1566, %v1564, %v1590
  %1595 = vrot.lane.b32.xlu0 %v1591, 64
  %v1596 = vpop.permute.xlu0 %1595
  %1597 = vrot.lane.b32.xlu0 %v1592, 64
  %v1598 = vpop.permute.xlu0 %1597
  %v1601 = vsel %vm120, %v1591, %v1596
  %v1602 = vsel %vm120, %v1592, %v1598
  %v1603 = vmul.f32 %v1591, %v219
  %v1604 = vmul.f32 %v1592, %v220
  %1607 = vrot.lane.b32.xlu0 %v1603, 64
  %v1608 = vpop.permute.xlu0 %1607
  %1609 = vrot.lane.b32.xlu0 %v1604, 64
  %v1610 = vpop.permute.xlu0 %1609
  %v1613 = vsel %vm120, %v1603, %v1608
  %v1614 = vsel %vm120, %v1604, %v1610
  %v1615 = vlaneseq
  %v1616 = vshrl.u32 %v1615, 7
  %v1617 = vsub.s32 0, %v1616
  %v1618 = vrot.slane %v349, %v1617
  %s1620 = sor.u32 256, 64
  %1621 = vbcast.lane.b32.xlu0 %v1618, %s1620
  %v1622 = vpop.permute.xlu0 %1621
  %v1623 = vlaneseq
  %v1624 = vshrl.u32 %v1623, 7
  %v1625 = vsub.s32 1, %v1624
  %v1626 = vrot.slane %v349, %v1625
  %s1628 = sor.u32 256, 64
  %1629 = vbcast.lane.b32.xlu0 %v1626, %s1628
  %v1630 = vpop.permute.xlu0 %1629
  %v1631 = vlaneseq
  %v1632 = vshrl.u32 %v1631, 7
  %v1633 = vsub.s32 2, %v1632
  %v1634 = vrot.slane %v349, %v1633
  %s1636 = sor.u32 256, 64
  %1637 = vbcast.lane.b32.xlu0 %v1634, %s1636
  %v1638 = vpop.permute.xlu0 %1637
  %v1639 = vlaneseq
  %v1640 = vshrl.u32 %v1639, 7
  %v1641 = vsub.s32 3, %v1640
  %v1642 = vrot.slane %v349, %v1641
  %s1644 = sor.u32 256, 64
  %1645 = vbcast.lane.b32.xlu0 %v1642, %s1644
  %v1646 = vpop.permute.xlu0 %1645
  %v1647 = vlaneseq
  %v1648 = vshrl.u32 %v1647, 7
  %v1649 = vsub.s32 4, %v1648
  %v1650 = vrot.slane %v349, %v1649
  %s1652 = sor.u32 256, 64
  %1653 = vbcast.lane.b32.xlu0 %v1650, %s1652
  %v1654 = vpop.permute.xlu0 %1653
  %v1655 = vlaneseq
  %v1656 = vshrl.u32 %v1655, 7
  %v1657 = vsub.s32 5, %v1656
  %v1658 = vrot.slane %v349, %v1657
  %s1660 = sor.u32 256, 64
  %1661 = vbcast.lane.b32.xlu0 %v1658, %s1660
  %v1662 = vpop.permute.xlu0 %1661
  %v1663 = vlaneseq
  %v1664 = vshrl.u32 %v1663, 7
  %v1665 = vsub.s32 6, %v1664
  %v1666 = vrot.slane %v349, %v1665
  %s1668 = sor.u32 256, 64
  %1669 = vbcast.lane.b32.xlu0 %v1666, %s1668
  %v1670 = vpop.permute.xlu0 %1669
  %v1671 = vlaneseq
  %v1672 = vshrl.u32 %v1671, 7
  %v1673 = vsub.s32 7, %v1672
  %v1674 = vrot.slane %v349, %v1673
  %s1676 = sor.u32 256, 64
  %1677 = vbcast.lane.b32.xlu0 %v1674, %s1676
  %v1678 = vpop.permute.xlu0 %1677
  %v1679 = vlaneseq
  %v1680 = vshrl.u32 %v1679, 7
  %v1681 = vsub.s32 0, %v1680
  %v1682 = vrot.slane %v353, %v1681
  %s1684 = sor.u32 256, 64
  %1685 = vbcast.lane.b32.xlu0 %v1682, %s1684
  %v1686 = vpop.permute.xlu0 %1685
  %v1687 = vlaneseq
  %v1688 = vshrl.u32 %v1687, 7
  %v1689 = vsub.s32 1, %v1688
  %v1690 = vrot.slane %v353, %v1689
  %s1692 = sor.u32 256, 64
  %1693 = vbcast.lane.b32.xlu0 %v1690, %s1692
  %v1694 = vpop.permute.xlu0 %1693
  %v1695 = vlaneseq
  %v1696 = vshrl.u32 %v1695, 7
  %v1697 = vsub.s32 2, %v1696
  %v1698 = vrot.slane %v353, %v1697
  %s1700 = sor.u32 256, 64
  %1701 = vbcast.lane.b32.xlu0 %v1698, %s1700
  %v1702 = vpop.permute.xlu0 %1701
  %v1703 = vlaneseq
  %v1704 = vshrl.u32 %v1703, 7
  %v1705 = vsub.s32 3, %v1704
  %v1706 = vrot.slane %v353, %v1705
  %s1708 = sor.u32 256, 64
  %1709 = vbcast.lane.b32.xlu0 %v1706, %s1708
  %v1710 = vpop.permute.xlu0 %1709
  %v1711 = vlaneseq
  %v1712 = vshrl.u32 %v1711, 7
  %v1713 = vsub.s32 4, %v1712
  %v1714 = vrot.slane %v353, %v1713
  %s1716 = sor.u32 256, 64
  %1717 = vbcast.lane.b32.xlu0 %v1714, %s1716
  %v1718 = vpop.permute.xlu0 %1717
  %v1719 = vlaneseq
  %v1720 = vshrl.u32 %v1719, 7
  %v1721 = vsub.s32 5, %v1720
  %v1722 = vrot.slane %v353, %v1721
  %s1724 = sor.u32 256, 64
  %1725 = vbcast.lane.b32.xlu0 %v1722, %s1724
  %v1726 = vpop.permute.xlu0 %1725
  %v1727 = vlaneseq
  %v1728 = vshrl.u32 %v1727, 7
  %v1729 = vsub.s32 6, %v1728
  %v1730 = vrot.slane %v353, %v1729
  %s1732 = sor.u32 256, 64
  %1733 = vbcast.lane.b32.xlu0 %v1730, %s1732
  %v1734 = vpop.permute.xlu0 %1733
  %v1735 = vlaneseq
  %v1736 = vshrl.u32 %v1735, 7
  %v1737 = vsub.s32 7, %v1736
  %v1738 = vrot.slane %v353, %v1737
  %s1740 = sor.u32 256, 64
  %1741 = vbcast.lane.b32.xlu0 %v1738, %s1740
  %v1742 = vpop.permute.xlu0 %1741
  %s1744 = sor.u32 256, 72
  %1745 = vbcast.lane.b32.xlu0 %v1618, %s1744
  %v1746 = vpop.permute.xlu0 %1745
  %s1748 = sor.u32 256, 72
  %1749 = vbcast.lane.b32.xlu0 %v1626, %s1748
  %v1750 = vpop.permute.xlu0 %1749
  %s1752 = sor.u32 256, 72
  %1753 = vbcast.lane.b32.xlu0 %v1634, %s1752
  %v1754 = vpop.permute.xlu0 %1753
  %s1756 = sor.u32 256, 72
  %1757 = vbcast.lane.b32.xlu0 %v1642, %s1756
  %v1758 = vpop.permute.xlu0 %1757
  %s1760 = sor.u32 256, 72
  %1761 = vbcast.lane.b32.xlu0 %v1650, %s1760
  %v1762 = vpop.permute.xlu0 %1761
  %s1764 = sor.u32 256, 72
  %1765 = vbcast.lane.b32.xlu0 %v1658, %s1764
  %v1766 = vpop.permute.xlu0 %1765
  %s1768 = sor.u32 256, 72
  %1769 = vbcast.lane.b32.xlu0 %v1666, %s1768
  %v1770 = vpop.permute.xlu0 %1769
  %s1772 = sor.u32 256, 72
  %1773 = vbcast.lane.b32.xlu0 %v1674, %s1772
  %v1774 = vpop.permute.xlu0 %1773
  %s1776 = sor.u32 256, 72
  %1777 = vbcast.lane.b32.xlu0 %v1682, %s1776
  %v1778 = vpop.permute.xlu0 %1777
  %s1780 = sor.u32 256, 72
  %1781 = vbcast.lane.b32.xlu0 %v1690, %s1780
  %v1782 = vpop.permute.xlu0 %1781
  %s1784 = sor.u32 256, 72
  %1785 = vbcast.lane.b32.xlu0 %v1698, %s1784
  %v1786 = vpop.permute.xlu0 %1785
  %s1788 = sor.u32 256, 72
  %1789 = vbcast.lane.b32.xlu0 %v1706, %s1788
  %v1790 = vpop.permute.xlu0 %1789
  %s1792 = sor.u32 256, 72
  %1793 = vbcast.lane.b32.xlu0 %v1714, %s1792
  %v1794 = vpop.permute.xlu0 %1793
  %s1796 = sor.u32 256, 72
  %1797 = vbcast.lane.b32.xlu0 %v1722, %s1796
  %v1798 = vpop.permute.xlu0 %1797
  %s1800 = sor.u32 256, 72
  %1801 = vbcast.lane.b32.xlu0 %v1730, %s1800
  %v1802 = vpop.permute.xlu0 %1801
  %s1804 = sor.u32 256, 72
  %1805 = vbcast.lane.b32.xlu0 %v1738, %s1804
  %v1806 = vpop.permute.xlu0 %1805
  %v1807 = vsel %vm120, %v1622, %v1746
  %v1808 = vsel %vm120, %v1630, %v1750
  %v1809 = vsel %vm120, %v1638, %v1754
  %v1810 = vsel %vm120, %v1646, %v1758
  %v1811 = vsel %vm120, %v1654, %v1762
  %v1812 = vsel %vm120, %v1662, %v1766
  %v1813 = vsel %vm120, %v1670, %v1770
  %v1814 = vsel %vm120, %v1678, %v1774
  %v1815 = vsel %vm120, %v1686, %v1778
  %v1816 = vsel %vm120, %v1694, %v1782
  %v1817 = vsel %vm120, %v1702, %v1786
  %v1818 = vsel %vm120, %v1710, %v1790
  %v1819 = vsel %vm120, %v1718, %v1794
  %v1820 = vsel %vm120, %v1726, %v1798
  %v1821 = vsel %vm120, %v1734, %v1802
  %v1822 = vsel %vm120, %v1742, %v1806
  %s1824 = sor.u32 256, 80
  %1825 = vbcast.lane.b32.xlu0 %v1618, %s1824
  %v1826 = vpop.permute.xlu0 %1825
  %s1828 = sor.u32 256, 80
  %1829 = vbcast.lane.b32.xlu0 %v1626, %s1828
  %v1830 = vpop.permute.xlu0 %1829
  %s1832 = sor.u32 256, 80
  %1833 = vbcast.lane.b32.xlu0 %v1634, %s1832
  %v1834 = vpop.permute.xlu0 %1833
  %s1836 = sor.u32 256, 80
  %1837 = vbcast.lane.b32.xlu0 %v1642, %s1836
  %v1838 = vpop.permute.xlu0 %1837
  %s1840 = sor.u32 256, 80
  %1841 = vbcast.lane.b32.xlu0 %v1650, %s1840
  %v1842 = vpop.permute.xlu0 %1841
  %s1844 = sor.u32 256, 80
  %1845 = vbcast.lane.b32.xlu0 %v1658, %s1844
  %v1846 = vpop.permute.xlu0 %1845
  %s1848 = sor.u32 256, 80
  %1849 = vbcast.lane.b32.xlu0 %v1666, %s1848
  %v1850 = vpop.permute.xlu0 %1849
  %s1852 = sor.u32 256, 80
  %1853 = vbcast.lane.b32.xlu0 %v1674, %s1852
  %v1854 = vpop.permute.xlu0 %1853
  %s1856 = sor.u32 256, 80
  %1857 = vbcast.lane.b32.xlu0 %v1682, %s1856
  %v1858 = vpop.permute.xlu0 %1857
  %s1860 = sor.u32 256, 80
  %1861 = vbcast.lane.b32.xlu0 %v1690, %s1860
  %v1862 = vpop.permute.xlu0 %1861
  %s1864 = sor.u32 256, 80
  %1865 = vbcast.lane.b32.xlu0 %v1698, %s1864
  %v1866 = vpop.permute.xlu0 %1865
  %s1868 = sor.u32 256, 80
  %1869 = vbcast.lane.b32.xlu0 %v1706, %s1868
  %v1870 = vpop.permute.xlu0 %1869
  %s1872 = sor.u32 256, 80
  %1873 = vbcast.lane.b32.xlu0 %v1714, %s1872
  %v1874 = vpop.permute.xlu0 %1873
  %s1876 = sor.u32 256, 80
  %1877 = vbcast.lane.b32.xlu0 %v1722, %s1876
  %v1878 = vpop.permute.xlu0 %1877
  %s1880 = sor.u32 256, 80
  %1881 = vbcast.lane.b32.xlu0 %v1730, %s1880
  %v1882 = vpop.permute.xlu0 %1881
  %s1884 = sor.u32 256, 80
  %1885 = vbcast.lane.b32.xlu0 %v1738, %s1884
  %v1886 = vpop.permute.xlu0 %1885
  %s1888 = sor.u32 256, 88
  %1889 = vbcast.lane.b32.xlu0 %v1618, %s1888
  %v1890 = vpop.permute.xlu0 %1889
  %s1892 = sor.u32 256, 88
  %1893 = vbcast.lane.b32.xlu0 %v1626, %s1892
  %v1894 = vpop.permute.xlu0 %1893
  %s1896 = sor.u32 256, 88
  %1897 = vbcast.lane.b32.xlu0 %v1634, %s1896
  %v1898 = vpop.permute.xlu0 %1897
  %s1900 = sor.u32 256, 88
  %1901 = vbcast.lane.b32.xlu0 %v1642, %s1900
  %v1902 = vpop.permute.xlu0 %1901
  %s1904 = sor.u32 256, 88
  %1905 = vbcast.lane.b32.xlu0 %v1650, %s1904
  %v1906 = vpop.permute.xlu0 %1905
  %s1908 = sor.u32 256, 88
  %1909 = vbcast.lane.b32.xlu0 %v1658, %s1908
  %v1910 = vpop.permute.xlu0 %1909
  %s1912 = sor.u32 256, 88
  %1913 = vbcast.lane.b32.xlu0 %v1666, %s1912
  %v1914 = vpop.permute.xlu0 %1913
  %s1916 = sor.u32 256, 88
  %1917 = vbcast.lane.b32.xlu0 %v1674, %s1916
  %v1918 = vpop.permute.xlu0 %1917
  %s1920 = sor.u32 256, 88
  %1921 = vbcast.lane.b32.xlu0 %v1682, %s1920
  %v1922 = vpop.permute.xlu0 %1921
  %s1924 = sor.u32 256, 88
  %1925 = vbcast.lane.b32.xlu0 %v1690, %s1924
  %v1926 = vpop.permute.xlu0 %1925
  %s1928 = sor.u32 256, 88
  %1929 = vbcast.lane.b32.xlu0 %v1698, %s1928
  %v1930 = vpop.permute.xlu0 %1929
  %s1932 = sor.u32 256, 88
  %1933 = vbcast.lane.b32.xlu0 %v1706, %s1932
  %v1934 = vpop.permute.xlu0 %1933
  %s1936 = sor.u32 256, 88
  %1937 = vbcast.lane.b32.xlu0 %v1714, %s1936
  %v1938 = vpop.permute.xlu0 %1937
  %s1940 = sor.u32 256, 88
  %1941 = vbcast.lane.b32.xlu0 %v1722, %s1940
  %v1942 = vpop.permute.xlu0 %1941
  %s1944 = sor.u32 256, 88
  %1945 = vbcast.lane.b32.xlu0 %v1730, %s1944
  %v1946 = vpop.permute.xlu0 %1945
  %s1948 = sor.u32 256, 88
  %1949 = vbcast.lane.b32.xlu0 %v1738, %s1948
  %v1950 = vpop.permute.xlu0 %1949
  %v1951 = vsel %vm120, %v1826, %v1890
  %v1952 = vsel %vm120, %v1830, %v1894
  %v1953 = vsel %vm120, %v1834, %v1898
  %v1954 = vsel %vm120, %v1838, %v1902
  %v1955 = vsel %vm120, %v1842, %v1906
  %v1956 = vsel %vm120, %v1846, %v1910
  %v1957 = vsel %vm120, %v1850, %v1914
  %v1958 = vsel %vm120, %v1854, %v1918
  %v1959 = vsel %vm120, %v1858, %v1922
  %v1960 = vsel %vm120, %v1862, %v1926
  %v1961 = vsel %vm120, %v1866, %v1930
  %v1962 = vsel %vm120, %v1870, %v1934
  %v1963 = vsel %vm120, %v1874, %v1938
  %v1964 = vsel %vm120, %v1878, %v1942
  %v1965 = vsel %vm120, %v1882, %v1946
  %v1966 = vsel %vm120, %v1886, %v1950
  %v1969 = vcombine.high %v1601, %v1601
  %v1971 = vunpack.c.l.s4 1966171168
  %v1972 = vunpack.c.0.s8 %v1971
  %v1973 = vlaneseq
  %v1974 = vshrl.u32 %v1973, 7
  %v1975 = vsub.s32 %v1972, %v1974
  %v1976 = vrot.slane %v1601, %v1975
  %v1978 = vunpack.c.l.s4 1966171168
  %v1979 = vunpack.c.0.s8 %v1978
  %v1980 = vlaneseq
  %v1981 = vshrl.u32 %v1980, 7
  %v1982 = vsub.s32 %v1979, %v1981
  %v1983 = vrot.slane %v1969, %v1982
  %v1984 = vcombine.high %v1976, %v1976
  %v1985 = vcombine.high %v1983, %v1983
  %v1987 = vunpack.c.l.s4 1966171168
  %v1988 = vunpack.c.0.s8 %v1987
  %v1989 = vlaneseq
  %v1990 = vshrl.u32 %v1989, 7
  %v1991 = vsub.s32 %v1988, %v1990
  %v1992 = vrot.slane %v1976, %v1991
  %v1994 = vunpack.c.l.s4 1966171168
  %v1995 = vunpack.c.0.s8 %v1994
  %v1996 = vlaneseq
  %v1997 = vshrl.u32 %v1996, 7
  %v1998 = vsub.s32 %v1995, %v1997
  %v1999 = vrot.slane %v1983, %v1998
  %v2001 = vunpack.c.l.s4 1966171168
  %v2002 = vunpack.c.0.s8 %v2001
  %v2003 = vlaneseq
  %v2004 = vshrl.u32 %v2003, 7
  %v2005 = vsub.s32 %v2002, %v2004
  %v2006 = vrot.slane %v1984, %v2005
  %v2008 = vunpack.c.l.s4 1966171168
  %v2009 = vunpack.c.0.s8 %v2008
  %v2010 = vlaneseq
  %v2011 = vshrl.u32 %v2010, 7
  %v2012 = vsub.s32 %v2009, %v2011
  %v2013 = vrot.slane %v1985, %v2012
  %v2014 = vcombine.high %v1992, %v1992
  %v2015 = vcombine.high %v1999, %v1999
  %v2016 = vcombine.high %v2006, %v2006
  %v2017 = vcombine.high %v2013, %v2013
  %v2018 = vcombine.high %v1602, %v1602
  %v2020 = vunpack.c.l.s4 1966171168
  %v2021 = vunpack.c.0.s8 %v2020
  %v2022 = vlaneseq
  %v2023 = vshrl.u32 %v2022, 7
  %v2024 = vsub.s32 %v2021, %v2023
  %v2025 = vrot.slane %v1602, %v2024
  %v2027 = vunpack.c.l.s4 1966171168
  %v2028 = vunpack.c.0.s8 %v2027
  %v2029 = vlaneseq
  %v2030 = vshrl.u32 %v2029, 7
  %v2031 = vsub.s32 %v2028, %v2030
  %v2032 = vrot.slane %v2018, %v2031
  %v2033 = vcombine.high %v2025, %v2025
  %v2034 = vcombine.high %v2032, %v2032
  %v2036 = vunpack.c.l.s4 1966171168
  %v2037 = vunpack.c.0.s8 %v2036
  %v2038 = vlaneseq
  %v2039 = vshrl.u32 %v2038, 7
  %v2040 = vsub.s32 %v2037, %v2039
  %v2041 = vrot.slane %v2025, %v2040
  %v2043 = vunpack.c.l.s4 1966171168
  %v2044 = vunpack.c.0.s8 %v2043
  %v2045 = vlaneseq
  %v2046 = vshrl.u32 %v2045, 7
  %v2047 = vsub.s32 %v2044, %v2046
  %v2048 = vrot.slane %v2032, %v2047
  %v2050 = vunpack.c.l.s4 1966171168
  %v2051 = vunpack.c.0.s8 %v2050
  %v2052 = vlaneseq
  %v2053 = vshrl.u32 %v2052, 7
  %v2054 = vsub.s32 %v2051, %v2053
  %v2055 = vrot.slane %v2033, %v2054
  %v2057 = vunpack.c.l.s4 1966171168
  %v2058 = vunpack.c.0.s8 %v2057
  %v2059 = vlaneseq
  %v2060 = vshrl.u32 %v2059, 7
  %v2061 = vsub.s32 %v2058, %v2060
  %v2062 = vrot.slane %v2034, %v2061
  %v2063 = vcombine.high %v2041, %v2041
  %v2064 = vcombine.high %v2048, %v2048
  %v2065 = vcombine.high %v2055, %v2055
  %v2066 = vcombine.high %v2062, %v2062
  %v2067 = vlaneseq
  %v2068 = vshrl.u32 %v2067, 7
  %v2069 = vsub.s32 0, %v2068
  %v2070 = vrot.slane %v1992, %v2069
  %v2071 = vlaneseq
  %v2072 = vshrl.u32 %v2071, 7
  %v2073 = vsub.s32 0, %v2072
  %v2074 = vrot.slane %v2006, %v2073
  %v2075 = vlaneseq
  %v2076 = vshrl.u32 %v2075, 7
  %v2077 = vsub.s32 0, %v2076
  %v2078 = vrot.slane %v2014, %v2077
  %v2079 = vlaneseq
  %v2080 = vshrl.u32 %v2079, 7
  %v2081 = vsub.s32 0, %v2080
  %v2082 = vrot.slane %v2016, %v2081
  %v2083 = vlaneseq
  %v2084 = vshrl.u32 %v2083, 7
  %v2085 = vsub.s32 0, %v2084
  %v2086 = vrot.slane %v1999, %v2085
  %v2087 = vlaneseq
  %v2088 = vshrl.u32 %v2087, 7
  %v2089 = vsub.s32 0, %v2088
  %v2090 = vrot.slane %v2013, %v2089
  %v2091 = vlaneseq
  %v2092 = vshrl.u32 %v2091, 7
  %v2093 = vsub.s32 0, %v2092
  %v2094 = vrot.slane %v2015, %v2093
  %v2095 = vlaneseq
  %v2096 = vshrl.u32 %v2095, 7
  %v2097 = vsub.s32 0, %v2096
  %v2098 = vrot.slane %v2017, %v2097
  %v2099 = vlaneseq
  %v2100 = vshrl.u32 %v2099, 7
  %v2101 = vsub.s32 0, %v2100
  %v2102 = vrot.slane %v2041, %v2101
  %v2103 = vlaneseq
  %v2104 = vshrl.u32 %v2103, 7
  %v2105 = vsub.s32 0, %v2104
  %v2106 = vrot.slane %v2055, %v2105
  %v2107 = vlaneseq
  %v2108 = vshrl.u32 %v2107, 7
  %v2109 = vsub.s32 0, %v2108
  %v2110 = vrot.slane %v2063, %v2109
  %v2111 = vlaneseq
  %v2112 = vshrl.u32 %v2111, 7
  %v2113 = vsub.s32 0, %v2112
  %v2114 = vrot.slane %v2065, %v2113
  %v2115 = vlaneseq
  %v2116 = vshrl.u32 %v2115, 7
  %v2117 = vsub.s32 0, %v2116
  %v2118 = vrot.slane %v2048, %v2117
  %v2119 = vlaneseq
  %v2120 = vshrl.u32 %v2119, 7
  %v2121 = vsub.s32 0, %v2120
  %v2122 = vrot.slane %v2062, %v2121
  %v2123 = vlaneseq
  %v2124 = vshrl.u32 %v2123, 7
  %v2125 = vsub.s32 0, %v2124
  %v2126 = vrot.slane %v2064, %v2125
  %v2127 = vlaneseq
  %v2128 = vshrl.u32 %v2127, 7
  %v2129 = vsub.s32 0, %v2128
  %v2130 = vrot.slane %v2066, %v2129
  %v2147 = vmul.f32 %v2070, %v75
  %v2148 = vmul.f32 %v2074, %v75
  %v2149 = vmul.f32 %v2078, %v75
  %v2150 = vmul.f32 %v2082, %v75
  %v2151 = vmul.f32 %v2086, %v75
  %v2152 = vmul.f32 %v2090, %v75
  %v2153 = vmul.f32 %v2094, %v75
  %v2154 = vmul.f32 %v2098, %v75
  %v2155 = vmul.f32 %v2102, %v75
  %v2156 = vmul.f32 %v2106, %v75
  %v2157 = vmul.f32 %v2110, %v75
  %v2158 = vmul.f32 %v2114, %v75
  %v2159 = vmul.f32 %v2118, %v75
  %v2160 = vmul.f32 %v2122, %v75
  %v2161 = vmul.f32 %v2126, %v75
  %v2162 = vmul.f32 %v2130, %v75
  %v2163 = vmul.f32 %v2147, 1.442695
  %v2164 = vpow.pop %v2163
  %v2165 = vmul.f32 %v2148, 1.442695
  %v2166 = vpow.pop %v2165
  %v2167 = vmul.f32 %v2149, 1.442695
  %v2168 = vpow.pop %v2167
  %v2169 = vmul.f32 %v2150, 1.442695
  %v2170 = vpow.pop %v2169
  %v2171 = vmul.f32 %v2151, 1.442695
  %v2172 = vpow.pop %v2171
  %v2173 = vmul.f32 %v2152, 1.442695
  %v2174 = vpow.pop %v2173
  %v2175 = vmul.f32 %v2153, 1.442695
  %v2176 = vpow.pop %v2175
  %v2177 = vmul.f32 %v2154, 1.442695
  %v2178 = vpow.pop %v2177
  %v2179 = vmul.f32 %v2155, 1.442695
  %v2180 = vpow.pop %v2179
  %v2181 = vmul.f32 %v2156, 1.442695
  %v2182 = vpow.pop %v2181
  %v2183 = vmul.f32 %v2157, 1.442695
  %v2184 = vpow.pop %v2183
  %v2185 = vmul.f32 %v2158, 1.442695
  %v2186 = vpow.pop %v2185
  %v2187 = vmul.f32 %v2159, 1.442695
  %v2188 = vpow.pop %v2187
  %v2189 = vmul.f32 %v2160, 1.442695
  %v2190 = vpow.pop %v2189
  %v2191 = vmul.f32 %v2161, 1.442695
  %v2192 = vpow.pop %v2191
  %v2193 = vmul.f32 %v2162, 1.442695
  %v2194 = vpow.pop %v2193
  %v2195 = vmul.f32 %v2164, %v1205
  %v2196 = vmul.f32 %v2166, %v1206
  %v2197 = vmul.f32 %v2168, %v1207
  %v2198 = vmul.f32 %v2170, %v1208
  %v2199 = vmul.f32 %v2172, %v1209
  %v2200 = vmul.f32 %v2174, %v1210
  %v2201 = vmul.f32 %v2176, %v1211
  %v2202 = vmul.f32 %v2178, %v1212
  %v2203 = vmul.f32 %v2180, %v1213
  %v2204 = vmul.f32 %v2182, %v1214
  %v2205 = vmul.f32 %v2184, %v1215
  %v2206 = vmul.f32 %v2186, %v1216
  %v2207 = vmul.f32 %v2188, %v1217
  %v2208 = vmul.f32 %v2190, %v1218
  %v2209 = vmul.f32 %v2192, %v1219
  %v2210 = vmul.f32 %v2194, %v1220
  %v2213 = vcombine.high %v1613, %v1613
  %v2215 = vunpack.c.l.s4 1966171168
  %v2216 = vunpack.c.0.s8 %v2215
  %v2217 = vlaneseq
  %v2218 = vshrl.u32 %v2217, 7
  %v2219 = vsub.s32 %v2216, %v2218
  %v2220 = vrot.slane %v1613, %v2219
  %v2222 = vunpack.c.l.s4 1966171168
  %v2223 = vunpack.c.0.s8 %v2222
  %v2224 = vlaneseq
  %v2225 = vshrl.u32 %v2224, 7
  %v2226 = vsub.s32 %v2223, %v2225
  %v2227 = vrot.slane %v2213, %v2226
  %v2228 = vcombine.high %v2220, %v2220
  %v2229 = vcombine.high %v2227, %v2227
  %v2231 = vunpack.c.l.s4 1966171168
  %v2232 = vunpack.c.0.s8 %v2231
  %v2233 = vlaneseq
  %v2234 = vshrl.u32 %v2233, 7
  %v2235 = vsub.s32 %v2232, %v2234
  %v2236 = vrot.slane %v2220, %v2235
  %v2238 = vunpack.c.l.s4 1966171168
  %v2239 = vunpack.c.0.s8 %v2238
  %v2240 = vlaneseq
  %v2241 = vshrl.u32 %v2240, 7
  %v2242 = vsub.s32 %v2239, %v2241
  %v2243 = vrot.slane %v2227, %v2242
  %v2245 = vunpack.c.l.s4 1966171168
  %v2246 = vunpack.c.0.s8 %v2245
  %v2247 = vlaneseq
  %v2248 = vshrl.u32 %v2247, 7
  %v2249 = vsub.s32 %v2246, %v2248
  %v2250 = vrot.slane %v2228, %v2249
  %v2252 = vunpack.c.l.s4 1966171168
  %v2253 = vunpack.c.0.s8 %v2252
  %v2254 = vlaneseq
  %v2255 = vshrl.u32 %v2254, 7
  %v2256 = vsub.s32 %v2253, %v2255
  %v2257 = vrot.slane %v2229, %v2256
  %v2258 = vcombine.high %v2236, %v2236
  %v2259 = vcombine.high %v2243, %v2243
  %v2260 = vcombine.high %v2250, %v2250
  %v2261 = vcombine.high %v2257, %v2257
  %v2262 = vcombine.high %v1614, %v1614
  %v2264 = vunpack.c.l.s4 1966171168
  %v2265 = vunpack.c.0.s8 %v2264
  %v2266 = vlaneseq
  %v2267 = vshrl.u32 %v2266, 7
  %v2268 = vsub.s32 %v2265, %v2267
  %v2269 = vrot.slane %v1614, %v2268
  %v2271 = vunpack.c.l.s4 1966171168
  %v2272 = vunpack.c.0.s8 %v2271
  %v2273 = vlaneseq
  %v2274 = vshrl.u32 %v2273, 7
  %v2275 = vsub.s32 %v2272, %v2274
  %v2276 = vrot.slane %v2262, %v2275
  %v2277 = vcombine.high %v2269, %v2269
  %v2278 = vcombine.high %v2276, %v2276
  %v2280 = vunpack.c.l.s4 1966171168
  %v2281 = vunpack.c.0.s8 %v2280
  %v2282 = vlaneseq
  %v2283 = vshrl.u32 %v2282, 7
  %v2284 = vsub.s32 %v2281, %v2283
  %v2285 = vrot.slane %v2269, %v2284
  %v2287 = vunpack.c.l.s4 1966171168
  %v2288 = vunpack.c.0.s8 %v2287
  %v2289 = vlaneseq
  %v2290 = vshrl.u32 %v2289, 7
  %v2291 = vsub.s32 %v2288, %v2290
  %v2292 = vrot.slane %v2276, %v2291
  %v2294 = vunpack.c.l.s4 1966171168
  %v2295 = vunpack.c.0.s8 %v2294
  %v2296 = vlaneseq
  %v2297 = vshrl.u32 %v2296, 7
  %v2298 = vsub.s32 %v2295, %v2297
  %v2299 = vrot.slane %v2277, %v2298
  %v2301 = vunpack.c.l.s4 1966171168
  %v2302 = vunpack.c.0.s8 %v2301
  %v2303 = vlaneseq
  %v2304 = vshrl.u32 %v2303, 7
  %v2305 = vsub.s32 %v2302, %v2304
  %v2306 = vrot.slane %v2278, %v2305
  %v2307 = vcombine.high %v2285, %v2285
  %v2308 = vcombine.high %v2292, %v2292
  %v2309 = vcombine.high %v2299, %v2299
  %v2310 = vcombine.high %v2306, %v2306
  %v2311 = vlaneseq
  %v2312 = vshrl.u32 %v2311, 7
  %v2313 = vsub.s32 0, %v2312
  %v2314 = vrot.slane %v2236, %v2313
  %v2315 = vlaneseq
  %v2316 = vshrl.u32 %v2315, 7
  %v2317 = vsub.s32 0, %v2316
  %v2318 = vrot.slane %v2250, %v2317
  %v2319 = vlaneseq
  %v2320 = vshrl.u32 %v2319, 7
  %v2321 = vsub.s32 0, %v2320
  %v2322 = vrot.slane %v2258, %v2321
  %v2323 = vlaneseq
  %v2324 = vshrl.u32 %v2323, 7
  %v2325 = vsub.s32 0, %v2324
  %v2326 = vrot.slane %v2260, %v2325
  %v2327 = vlaneseq
  %v2328 = vshrl.u32 %v2327, 7
  %v2329 = vsub.s32 0, %v2328
  %v2330 = vrot.slane %v2243, %v2329
  %v2331 = vlaneseq
  %v2332 = vshrl.u32 %v2331, 7
  %v2333 = vsub.s32 0, %v2332
  %v2334 = vrot.slane %v2257, %v2333
  %v2335 = vlaneseq
  %v2336 = vshrl.u32 %v2335, 7
  %v2337 = vsub.s32 0, %v2336
  %v2338 = vrot.slane %v2259, %v2337
  %v2339 = vlaneseq
  %v2340 = vshrl.u32 %v2339, 7
  %v2341 = vsub.s32 0, %v2340
  %v2342 = vrot.slane %v2261, %v2341
  %v2343 = vlaneseq
  %v2344 = vshrl.u32 %v2343, 7
  %v2345 = vsub.s32 0, %v2344
  %v2346 = vrot.slane %v2285, %v2345
  %v2347 = vlaneseq
  %v2348 = vshrl.u32 %v2347, 7
  %v2349 = vsub.s32 0, %v2348
  %v2350 = vrot.slane %v2299, %v2349
  %v2351 = vlaneseq
  %v2352 = vshrl.u32 %v2351, 7
  %v2353 = vsub.s32 0, %v2352
  %v2354 = vrot.slane %v2307, %v2353
  %v2355 = vlaneseq
  %v2356 = vshrl.u32 %v2355, 7
  %v2357 = vsub.s32 0, %v2356
  %v2358 = vrot.slane %v2309, %v2357
  %v2359 = vlaneseq
  %v2360 = vshrl.u32 %v2359, 7
  %v2361 = vsub.s32 0, %v2360
  %v2362 = vrot.slane %v2292, %v2361
  %v2363 = vlaneseq
  %v2364 = vshrl.u32 %v2363, 7
  %v2365 = vsub.s32 0, %v2364
  %v2366 = vrot.slane %v2306, %v2365
  %v2367 = vlaneseq
  %v2368 = vshrl.u32 %v2367, 7
  %v2369 = vsub.s32 0, %v2368
  %v2370 = vrot.slane %v2308, %v2369
  %v2371 = vlaneseq
  %v2372 = vshrl.u32 %v2371, 7
  %v2373 = vsub.s32 0, %v2372
  %v2374 = vrot.slane %v2310, %v2373
  %v2391 = vmul.f32 %v2314, %v1807
  %v2392 = vmul.f32 %v2318, %v1808
  %v2393 = vmul.f32 %v2322, %v1809
  %v2394 = vmul.f32 %v2326, %v1810
  %v2395 = vmul.f32 %v2330, %v1811
  %v2396 = vmul.f32 %v2334, %v1812
  %v2397 = vmul.f32 %v2338, %v1813
  %v2398 = vmul.f32 %v2342, %v1814
  %v2399 = vmul.f32 %v2346, %v1815
  %v2400 = vmul.f32 %v2350, %v1816
  %v2401 = vmul.f32 %v2354, %v1817
  %v2402 = vmul.f32 %v2358, %v1818
  %v2403 = vmul.f32 %v2362, %v1819
  %v2404 = vmul.f32 %v2366, %v1820
  %v2405 = vmul.f32 %v2370, %v1821
  %v2406 = vmul.f32 %v2374, %v1822
  %v2407 = vadd.f32 %v2195, %v2391
  %v2408 = vadd.f32 %v2196, %v2392
  %v2409 = vadd.f32 %v2197, %v2393
  %v2410 = vadd.f32 %v2198, %v2394
  %v2411 = vadd.f32 %v2199, %v2395
  %v2412 = vadd.f32 %v2200, %v2396
  %v2413 = vadd.f32 %v2201, %v2397
  %v2414 = vadd.f32 %v2202, %v2398
  %v2415 = vadd.f32 %v2203, %v2399
  %v2416 = vadd.f32 %v2204, %v2400
  %v2417 = vadd.f32 %v2205, %v2401
  %v2418 = vadd.f32 %v2206, %v2402
  %v2419 = vadd.f32 %v2207, %v2403
  %v2420 = vadd.f32 %v2208, %v2404
  %v2421 = vadd.f32 %v2209, %v2405
  %v2422 = vadd.f32 %v2210, %v2406
  %v2423 = vmul.f32 %v2407, %v1951
  %v2424 = vmul.f32 %v2408, %v1952
  %v2425 = vmul.f32 %v2409, %v1953
  %v2426 = vmul.f32 %v2410, %v1954
  %v2427 = vmul.f32 %v2411, %v1955
  %v2428 = vmul.f32 %v2412, %v1956
  %v2429 = vmul.f32 %v2413, %v1957
  %v2430 = vmul.f32 %v2414, %v1958
  %v2431 = vmul.f32 %v2415, %v1959
  %v2432 = vmul.f32 %v2416, %v1960
  %v2433 = vmul.f32 %v2417, %v1961
  %v2434 = vmul.f32 %v2418, %v1962
  %v2435 = vmul.f32 %v2419, %v1963
  %v2436 = vmul.f32 %v2420, %v1964
  %v2437 = vmul.f32 %v2421, %v1965
  %v2438 = vmul.f32 %v2422, %v1966
  %v2439 = vrot.slane %v2423, 4
  %v2440 = vadd.f32 %v2423, %v2439
  %v2441 = vrot.slane %v2440, 2
  %v2442 = vadd.f32 %v2440, %v2441
  %v2443 = vrot.slane %v2442, 1
  %v2444 = vadd.f32 %v2442, %v2443
  %v2445 = vrot.slane %v2424, 4
  %v2446 = vadd.f32 %v2424, %v2445
  %v2447 = vrot.slane %v2446, 2
  %v2448 = vadd.f32 %v2446, %v2447
  %v2449 = vrot.slane %v2448, 1
  %v2450 = vadd.f32 %v2448, %v2449
  %v2451 = vrot.slane %v2425, 4
  %v2452 = vadd.f32 %v2425, %v2451
  %v2453 = vrot.slane %v2452, 2
  %v2454 = vadd.f32 %v2452, %v2453
  %v2455 = vrot.slane %v2454, 1
  %v2456 = vadd.f32 %v2454, %v2455
  %v2457 = vrot.slane %v2426, 4
  %v2458 = vadd.f32 %v2426, %v2457
  %v2459 = vrot.slane %v2458, 2
  %v2460 = vadd.f32 %v2458, %v2459
  %v2461 = vrot.slane %v2460, 1
  %v2462 = vadd.f32 %v2460, %v2461
  %v2463 = vrot.slane %v2427, 4
  %v2464 = vadd.f32 %v2427, %v2463
  %v2465 = vrot.slane %v2464, 2
  %v2466 = vadd.f32 %v2464, %v2465
  %v2467 = vrot.slane %v2466, 1
  %v2468 = vadd.f32 %v2466, %v2467
  %v2469 = vrot.slane %v2428, 4
  %v2470 = vadd.f32 %v2428, %v2469
  %v2471 = vrot.slane %v2470, 2
  %v2472 = vadd.f32 %v2470, %v2471
  %v2473 = vrot.slane %v2472, 1
  %v2474 = vadd.f32 %v2472, %v2473
  %v2475 = vrot.slane %v2429, 4
  %v2476 = vadd.f32 %v2429, %v2475
  %v2477 = vrot.slane %v2476, 2
  %v2478 = vadd.f32 %v2476, %v2477
  %v2479 = vrot.slane %v2478, 1
  %v2480 = vadd.f32 %v2478, %v2479
  %v2481 = vrot.slane %v2430, 4
  %v2482 = vadd.f32 %v2430, %v2481
  %v2483 = vrot.slane %v2482, 2
  %v2484 = vadd.f32 %v2482, %v2483
  %v2485 = vrot.slane %v2484, 1
  %v2486 = vadd.f32 %v2484, %v2485
  %v2487 = vrot.slane %v2431, 4
  %v2488 = vadd.f32 %v2431, %v2487
  %v2489 = vrot.slane %v2488, 2
  %v2490 = vadd.f32 %v2488, %v2489
  %v2491 = vrot.slane %v2490, 1
  %v2492 = vadd.f32 %v2490, %v2491
  %v2493 = vrot.slane %v2432, 4
  %v2494 = vadd.f32 %v2432, %v2493
  %v2495 = vrot.slane %v2494, 2
  %v2496 = vadd.f32 %v2494, %v2495
  %v2497 = vrot.slane %v2496, 1
  %v2498 = vadd.f32 %v2496, %v2497
  %v2499 = vrot.slane %v2433, 4
  %v2500 = vadd.f32 %v2433, %v2499
  %v2501 = vrot.slane %v2500, 2
  %v2502 = vadd.f32 %v2500, %v2501
  %v2503 = vrot.slane %v2502, 1
  %v2504 = vadd.f32 %v2502, %v2503
  %v2505 = vrot.slane %v2434, 4
  %v2506 = vadd.f32 %v2434, %v2505
  %v2507 = vrot.slane %v2506, 2
  %v2508 = vadd.f32 %v2506, %v2507
  %v2509 = vrot.slane %v2508, 1
  %v2510 = vadd.f32 %v2508, %v2509
  %v2511 = vrot.slane %v2435, 4
  %v2512 = vadd.f32 %v2435, %v2511
  %v2513 = vrot.slane %v2512, 2
  %v2514 = vadd.f32 %v2512, %v2513
  %v2515 = vrot.slane %v2514, 1
  %v2516 = vadd.f32 %v2514, %v2515
  %v2517 = vrot.slane %v2436, 4
  %v2518 = vadd.f32 %v2436, %v2517
  %v2519 = vrot.slane %v2518, 2
  %v2520 = vadd.f32 %v2518, %v2519
  %v2521 = vrot.slane %v2520, 1
  %v2522 = vadd.f32 %v2520, %v2521
  %v2523 = vrot.slane %v2437, 4
  %v2524 = vadd.f32 %v2437, %v2523
  %v2525 = vrot.slane %v2524, 2
  %v2526 = vadd.f32 %v2524, %v2525
  %v2527 = vrot.slane %v2526, 1
  %v2528 = vadd.f32 %v2526, %v2527
  %v2529 = vrot.slane %v2438, 4
  %v2530 = vadd.f32 %v2438, %v2529
  %v2531 = vrot.slane %v2530, 2
  %v2532 = vadd.f32 %v2530, %v2531
  %v2533 = vrot.slane %v2532, 1
  %v2534 = vadd.f32 %v2532, %v2533
  %2551 = vrot.lane.b32.xlu0 %v2444, 64
  %v2552 = vpop.permute.xlu0 %2551
  %2553 = vrot.lane.b32.xlu0 %v2450, 64
  %v2554 = vpop.permute.xlu0 %2553
  %2555 = vrot.lane.b32.xlu0 %v2456, 64
  %v2556 = vpop.permute.xlu0 %2555
  %2557 = vrot.lane.b32.xlu0 %v2462, 64
  %v2558 = vpop.permute.xlu0 %2557
  %2559 = vrot.lane.b32.xlu0 %v2468, 64
  %v2560 = vpop.permute.xlu0 %2559
  %2561 = vrot.lane.b32.xlu0 %v2474, 64
  %v2562 = vpop.permute.xlu0 %2561
  %2563 = vrot.lane.b32.xlu0 %v2480, 64
  %v2564 = vpop.permute.xlu0 %2563
  %2565 = vrot.lane.b32.xlu0 %v2486, 64
  %v2566 = vpop.permute.xlu0 %2565
  %2567 = vrot.lane.b32.xlu0 %v2492, 64
  %v2568 = vpop.permute.xlu0 %2567
  %2569 = vrot.lane.b32.xlu0 %v2498, 64
  %v2570 = vpop.permute.xlu0 %2569
  %2571 = vrot.lane.b32.xlu0 %v2504, 64
  %v2572 = vpop.permute.xlu0 %2571
  %2573 = vrot.lane.b32.xlu0 %v2510, 64
  %v2574 = vpop.permute.xlu0 %2573
  %2575 = vrot.lane.b32.xlu0 %v2516, 64
  %v2576 = vpop.permute.xlu0 %2575
  %2577 = vrot.lane.b32.xlu0 %v2522, 64
  %v2578 = vpop.permute.xlu0 %2577
  %2579 = vrot.lane.b32.xlu0 %v2528, 64
  %v2580 = vpop.permute.xlu0 %2579
  %2581 = vrot.lane.b32.xlu0 %v2534, 64
  %v2582 = vpop.permute.xlu0 %2581
  %v2599 = vadd.f32 %v2444, %v2552
  %v2600 = vadd.f32 %v2450, %v2554
  %v2601 = vadd.f32 %v2456, %v2556
  %v2602 = vadd.f32 %v2462, %v2558
  %v2603 = vadd.f32 %v2468, %v2560
  %v2604 = vadd.f32 %v2474, %v2562
  %v2605 = vadd.f32 %v2480, %v2564
  %v2606 = vadd.f32 %v2486, %v2566
  %v2607 = vadd.f32 %v2492, %v2568
  %v2608 = vadd.f32 %v2498, %v2570
  %v2609 = vadd.f32 %v2504, %v2572
  %v2610 = vadd.f32 %v2510, %v2574
  %v2611 = vadd.f32 %v2516, %v2576
  %v2612 = vadd.f32 %v2522, %v2578
  %v2613 = vadd.f32 %v2528, %v2580
  %v2614 = vadd.f32 %v2534, %v2582
  %v2615 = vmul.f32 %v1417, %v219
  %v2616 = vmul.f32 %v1417, %v220
  %v2619 = vrot.slane %v2615, 1
  %v2620 = vrot.slane %v2615, 2
  %v2621 = vrot.slane %v2615, 3
  %v2622 = vrot.slane %v2615, 4
  %v2623 = vrot.slane %v2615, 5
  %v2624 = vrot.slane %v2615, 6
  %v2625 = vrot.slane %v2615, 7
  %v2626 = vrot.slane %v2616, 1
  %v2627 = vrot.slane %v2616, 2
  %v2628 = vrot.slane %v2616, 3
  %v2629 = vrot.slane %v2616, 4
  %v2630 = vrot.slane %v2616, 5
  %v2631 = vrot.slane %v2616, 6
  %v2632 = vrot.slane %v2616, 7
  %v2649 = vadd.f32 %v2599, %v2615
  %v2650 = vadd.f32 %v2600, %v2619
  %v2651 = vadd.f32 %v2601, %v2620
  %v2652 = vadd.f32 %v2602, %v2621
  %v2653 = vadd.f32 %v2603, %v2622
  %v2654 = vadd.f32 %v2604, %v2623
  %v2655 = vadd.f32 %v2605, %v2624
  %v2656 = vadd.f32 %v2606, %v2625
  %v2657 = vadd.f32 %v2607, %v2616
  %v2658 = vadd.f32 %v2608, %v2626
  %v2659 = vadd.f32 %v2609, %v2627
  %v2660 = vadd.f32 %v2610, %v2628
  %v2661 = vadd.f32 %v2611, %v2629
  %v2662 = vadd.f32 %v2612, %v2630
  %v2663 = vadd.f32 %v2613, %v2631
  %v2664 = vadd.f32 %v2614, %v2632
  %v2665 = vxor.u32 %v161, 2147483648
  %v2666 = vxor.u32 %v165, 2147483648
  %v2667 = vmul.f32 %v2665, 1.442695
  %v2668 = vpow.pop %v2667
  %v2669 = vmul.f32 %v2666, 1.442695
  %v2670 = vpow.pop %v2669
  %v2671 = vadd.f32 %v2668, 1.0
  %v2672 = vadd.f32 %v2670, 1.0
  %v2673 = vrcp.pop %v2671
  %v2674 = vmul.f32 1.0, %v2673
  %v2675 = vrcp.pop %v2672
  %v2676 = vmul.f32 1.0, %v2675
  %v2677 = vmul.f32 %v161, %v2674
  %v2678 = vmul.f32 %v165, %v2676
  %v2681 = vrot.slane %v2677, 1
  %v2682 = vrot.slane %v2677, 2
  %v2683 = vrot.slane %v2677, 3
  %v2684 = vrot.slane %v2677, 4
  %v2685 = vrot.slane %v2677, 5
  %v2686 = vrot.slane %v2677, 6
  %v2687 = vrot.slane %v2677, 7
  %v2688 = vrot.slane %v2678, 1
  %v2689 = vrot.slane %v2678, 2
  %v2690 = vrot.slane %v2678, 3
  %v2691 = vrot.slane %v2678, 4
  %v2692 = vrot.slane %v2678, 5
  %v2693 = vrot.slane %v2678, 6
  %v2694 = vrot.slane %v2678, 7
  %2695 = vrot.lane.b32.xlu0 %v2677, 64
  %v2696 = vpop.permute.xlu0 %2695
  %2697 = vrot.lane.b32.xlu0 %v2681, 64
  %v2698 = vpop.permute.xlu0 %2697
  %2699 = vrot.lane.b32.xlu0 %v2682, 64
  %v2700 = vpop.permute.xlu0 %2699
  %2701 = vrot.lane.b32.xlu0 %v2683, 64
  %v2702 = vpop.permute.xlu0 %2701
  %2703 = vrot.lane.b32.xlu0 %v2684, 64
  %v2704 = vpop.permute.xlu0 %2703
  %2705 = vrot.lane.b32.xlu0 %v2685, 64
  %v2706 = vpop.permute.xlu0 %2705
  %2707 = vrot.lane.b32.xlu0 %v2686, 64
  %v2708 = vpop.permute.xlu0 %2707
  %2709 = vrot.lane.b32.xlu0 %v2687, 64
  %v2710 = vpop.permute.xlu0 %2709
  %2711 = vrot.lane.b32.xlu0 %v2678, 64
  %v2712 = vpop.permute.xlu0 %2711
  %2713 = vrot.lane.b32.xlu0 %v2688, 64
  %v2714 = vpop.permute.xlu0 %2713
  %2715 = vrot.lane.b32.xlu0 %v2689, 64
  %v2716 = vpop.permute.xlu0 %2715
  %2717 = vrot.lane.b32.xlu0 %v2690, 64
  %v2718 = vpop.permute.xlu0 %2717
  %2719 = vrot.lane.b32.xlu0 %v2691, 64
  %v2720 = vpop.permute.xlu0 %2719
  %2721 = vrot.lane.b32.xlu0 %v2692, 64
  %v2722 = vpop.permute.xlu0 %2721
  %2723 = vrot.lane.b32.xlu0 %v2693, 64
  %v2724 = vpop.permute.xlu0 %2723
  %2725 = vrot.lane.b32.xlu0 %v2694, 64
  %v2726 = vpop.permute.xlu0 %2725
  %v2743 = vmul.f32 %v2649, %v2696
  %v2744 = vmul.f32 %v2650, %v2698
  %v2745 = vmul.f32 %v2651, %v2700
  %v2746 = vmul.f32 %v2652, %v2702
  %v2747 = vmul.f32 %v2653, %v2704
  %v2748 = vmul.f32 %v2654, %v2706
  %v2749 = vmul.f32 %v2655, %v2708
  %v2750 = vmul.f32 %v2656, %v2710
  %v2751 = vmul.f32 %v2657, %v2712
  %v2752 = vmul.f32 %v2658, %v2714
  %v2753 = vmul.f32 %v2659, %v2716
  %v2754 = vmul.f32 %v2660, %v2718
  %v2755 = vmul.f32 %v2661, %v2720
  %v2756 = vmul.f32 %v2662, %v2722
  %v2757 = vmul.f32 %v2663, %v2724
  %v2758 = vmul.f32 %v2664, %v2726
  %v2775 = vrot.slane %v1548, 7
  %vm2776 = vcmask 1041409
  %v2777 = vsel %vm2776, %v2775, %v1547
  %v2778 = vrot.slane %v1549, 6
  %vm2779 = vcmask 1042434
  %v2780 = vsel %vm2779, %v2778, %v2777
  %v2781 = vrot.slane %v1550, 5
  %vm2782 = vcmask 1043459
  %v2783 = vsel %vm2782, %v2781, %v2780
  %v2784 = vrot.slane %v1551, 4
  %vm2785 = vcmask 1044484
  %v2786 = vsel %vm2785, %v2784, %v2783
  %v2787 = vrot.slane %v1552, 3
  %vm2788 = vcmask 1045509
  %v2789 = vsel %vm2788, %v2787, %v2786
  %v2790 = vrot.slane %v1553, 2
  %vm2791 = vcmask 1046534
  %v2792 = vsel %vm2791, %v2790, %v2789
  %v2793 = vrot.slane %v1554, 1
  %vm2794 = vcmask 1047559
  %v2795 = vsel %vm2794, %v2793, %v2792
  %v2796 = vrot.slane %v1556, 7
  %v2797 = vsel %vm2776, %v2796, %v1555
  %v2798 = vrot.slane %v1557, 6
  %v2799 = vsel %vm2779, %v2798, %v2797
  %v2800 = vrot.slane %v1558, 5
  %v2801 = vsel %vm2782, %v2800, %v2799
  %v2802 = vrot.slane %v1559, 4
  %v2803 = vsel %vm2785, %v2802, %v2801
  %v2804 = vrot.slane %v1560, 3
  %v2805 = vsel %vm2788, %v2804, %v2803
  %v2806 = vrot.slane %v1561, 2
  %v2807 = vsel %vm2791, %v2806, %v2805
  %v2808 = vrot.slane %v1562, 1
  %v2809 = vsel %vm2794, %v2808, %v2807
  %v2828 = vrot.slane %v2744, 7
  %v2829 = vsel %vm2776, %v2828, %v2743
  %v2830 = vrot.slane %v2745, 6
  %v2831 = vsel %vm2779, %v2830, %v2829
  %v2832 = vrot.slane %v2746, 5
  %v2833 = vsel %vm2782, %v2832, %v2831
  %v2834 = vrot.slane %v2747, 4
  %v2835 = vsel %vm2785, %v2834, %v2833
  %v2836 = vrot.slane %v2748, 3
  %v2837 = vsel %vm2788, %v2836, %v2835
  %v2838 = vrot.slane %v2749, 2
  %v2839 = vsel %vm2791, %v2838, %v2837
  %v2840 = vrot.slane %v2750, 1
  %v2841 = vsel %vm2794, %v2840, %v2839
  %v2842 = vrot.slane %v2752, 7
  %v2843 = vsel %vm2776, %v2842, %v2751
  %v2844 = vrot.slane %v2753, 6
  %v2845 = vsel %vm2779, %v2844, %v2843
  %v2846 = vrot.slane %v2754, 5
  %v2847 = vsel %vm2782, %v2846, %v2845
  %v2848 = vrot.slane %v2755, 4
  %v2849 = vsel %vm2785, %v2848, %v2847
  %v2850 = vrot.slane %v2756, 3
  %v2851 = vsel %vm2788, %v2850, %v2849
  %v2852 = vrot.slane %v2757, 2
  %v2853 = vsel %vm2791, %v2852, %v2851
  %v2854 = vrot.slane %v2758, 1
  %v2855 = vsel %vm2794, %v2854, %v2853
  %2856 = vrot.lane.b32.xlu0 %v2841, 64
  %v2857 = vpop.permute.xlu0 %2856
  %2858 = vrot.lane.b32.xlu0 %v2855, 64
  %v2859 = vpop.permute.xlu0 %2858
  %v2862 = vsel %vm120, %v2795, %v2857
  %v2863 = vsel %vm120, %v2809, %v2859
  %v2864 = vld [vmem:[%s8] sm:$0xf]
  %v2865 = vld [vmem:[%s8 + $0x4] sm:$0xf]
  %v2866 = vld [vmem:[%s8 + $0x8] sm:$0xf]
  %v2867 = vld [vmem:[%s8 + $0xc] sm:$0xf]
  %v2868 = vld [vmem:[%s8 + $0x10] sm:$0xf]
  %v2869 = vld [vmem:[%s8 + $0x14] sm:$0xf]
  %v2870 = vld [vmem:[%s8 + $0x18] sm:$0xf]
  %v2871 = vld [vmem:[%s8 + $0x1c] sm:$0xf]
  %v2872 = vld [vmem:[%s8 + $0x20] sm:$0xf]
  %v2873 = vld [vmem:[%s8 + $0x24] sm:$0xf]
  %v2874 = vld [vmem:[%s8 + $0x28] sm:$0xf]
  %v2875 = vld [vmem:[%s8 + $0x2c] sm:$0xf]
  %v2876 = vld [vmem:[%s8 + $0x30] sm:$0xf]
  %v2877 = vld [vmem:[%s8 + $0x34] sm:$0xf]
  %v2878 = vld [vmem:[%s8 + $0x38] sm:$0xf]
  %v2879 = vld [vmem:[%s8 + $0x3c] sm:$0xf]
  %v2880 = vpack.c.bf16 %v2863, %v2862
  %v2881 = vld [vmem:[%s9] sm:$0x1]
  %v2883 = vlaneseq
  %v2884 = vshrl.u32 %v2883, 7
  %v2885 = vsub.s32 0, %v2884
  %v2886 = vrot.slane %v2881, %v2885
  %v2904 = vunpack.c.l.b16 %v2864
  %v2905 = vunpack.c.l.b16 %v2865
  %v2906 = vunpack.c.l.b16 %v2866
  %v2907 = vunpack.c.l.b16 %v2867
  %v2908 = vunpack.c.l.b16 %v2868
  %v2909 = vunpack.c.l.b16 %v2869
  %v2910 = vunpack.c.l.b16 %v2870
  %v2911 = vunpack.c.l.b16 %v2871
  %v2912 = vunpack.c.l.b16 %v2872
  %v2913 = vunpack.c.l.b16 %v2873
  %v2914 = vunpack.c.l.b16 %v2874
  %v2915 = vunpack.c.l.b16 %v2875
  %v2916 = vunpack.c.l.b16 %v2876
  %v2917 = vunpack.c.l.b16 %v2877
  %v2918 = vunpack.c.l.b16 %v2878
  %v2919 = vunpack.c.l.b16 %v2879
  %v2920 = vpack.c.b16 %v2905, %v2904
  %v2921 = vpack.c.b16 %v2907, %v2906
  %v2922 = vpack.c.b16 %v2909, %v2908
  %v2923 = vpack.c.b16 %v2911, %v2910
  %v2924 = vpack.c.b16 %v2913, %v2912
  %v2925 = vpack.c.b16 %v2915, %v2914
  %v2926 = vpack.c.b16 %v2917, %v2916
  %v2927 = vpack.c.b16 %v2919, %v2918
  %2936 = vmatprep.subr.bf16.mxu0 0
  %2937 = vmatpush1.bf16.msra.mxu0 %v2927
  %2938 = vmatprep.subr.bf16.mxu0 0
  %2939 = vmatpush1.bf16.msra.mxu0 %v2926
  %2940 = vmatprep.subr.bf16.mxu0 0
  %2941 = vmatpush1.bf16.msra.mxu0 %v2925
  %2942 = vmatprep.subr.bf16.mxu0 0
  %2943 = vmatpush1.bf16.msra.mxu0 %v2924
  %2944 = vmatprep.subr.bf16.mxu0 0
  %2945 = vmatpush1.bf16.msra.mxu0 %v2923
  %2946 = vmatprep.subr.bf16.mxu0 0
  %2947 = vmatpush1.bf16.msra.mxu0 %v2922
  %2948 = vmatprep.subr.bf16.mxu0 0
  %2949 = vmatpush1.bf16.msra.mxu0 %v2921
  %2950 = vmatprep.subr.bf16.mxu0 0
  %2951 = vmatpush1.bf16.msra.mxu0 %v2920
  %2952 = vmatprep.subr.bf16.mxu0 0
  %2953 = vmatpush2.bf16.msra.mxu0 0
  %2954 = vmatprep.subr.bf16.mxu0 0
  %2955 = vmatpush2.bf16.msra.mxu0 0
  %2956 = vmatprep.subr.bf16.mxu0 0
  %2957 = vmatpush2.bf16.msra.mxu0 0
  %2958 = vmatprep.subr.bf16.mxu0 0
  %2959 = vmatpush2.bf16.msra.mxu0 0
  %2960 = vmatprep.subr.bf16.mxu0 0
  %2961 = vmatpush2.bf16.msra.mxu0 0
  %2962 = vmatprep.subr.bf16.mxu0 0
  %2963 = vmatpush2.bf16.msra.mxu0 0
  %2964 = vmatprep.subr.bf16.mxu0 0
  %2965 = vmatpush2.bf16.msra.mxu0 0
  %2966 = vmatprep.subr.bf16.mxu0 0
  %2967 = vmatpush2.bf16.msra.mxu0 0
  %2968 = vmatprep.mubr.bf16.mxu0 0
  %2969 = vmatmul.mubr.bf16.gmra.mxu0 %v2880
  %v2970 = vpop.f32.mrf.mxu0
  %v2971 = vadd.f32 %v2886, %v2970
  %v2972 = vpop.f32.mrf.mxu0
  %v2973 = vpop.f32.mrf.mxu0
  %v2974 = vadd.f32 %v2886, %v2973
  %v2975 = vpop.f32.mrf.mxu0
  %2976 = vdwg.mxu0
  %v2977 = vmax.f32 %v2971, 0.0
  %v2978 = vmax.f32 %v2974, 0.0
  %v2979 = vld [vmem:[%s10] sm:$0xf]
  %v2980 = vld [vmem:[%s10 + $0x4] sm:$0xf]
  %v2981 = vld [vmem:[%s10 + $0x8] sm:$0xf]
  %v2982 = vld [vmem:[%s10 + $0xc] sm:$0xf]
  %v2983 = vpack.c.bf16 %v2978, %v2977
  %v2984 = vld [vmem:[%s11] sm:$0x1]
  %v2986 = vlaneseq
  %v2987 = vshrl.u32 %v2986, 7
  %v2988 = vsub.s32 0, %v2987
  %v2989 = vrot.slane %v2984, %v2988
  %v2995 = vunpack.c.l.b16 %v2979
  %v2996 = vunpack.c.l.b16 %v2980
  %v2997 = vunpack.c.l.b16 %v2981
  %v2998 = vunpack.c.l.b16 %v2982
  %v2999 = vpack.c.b16 %v2996, %v2995
  %v3000 = vpack.c.b16 %v2998, %v2997
  %vm3003 = vcmask 261120
  %v3005 = vsel %vm3003, %v2983, 0
  %3007 = vmatprep.subr.bf16.mxu0 0
  %3008 = vmatpush1.bf16.msra.mxu0 0
  %3009 = vmatprep.subr.bf16.mxu0 0
  %3010 = vmatpush1.bf16.msra.mxu0 0
  %3011 = vmatprep.subr.bf16.mxu0 0
  %3012 = vmatpush1.bf16.msra.mxu0 0
  %3013 = vmatprep.subr.bf16.mxu0 0
  %3014 = vmatpush1.bf16.msra.mxu0 0
  %3015 = vmatprep.subr.bf16.mxu0 0
  %3016 = vmatpush1.bf16.msra.mxu0 0
  %3017 = vmatprep.subr.bf16.mxu0 0
  %3018 = vmatpush1.bf16.msra.mxu0 0
  %3019 = vmatprep.subr.bf16.mxu0 0
  %3020 = vmatpush1.bf16.msra.mxu0 %v3000
  %3021 = vmatprep.subr.bf16.mxu0 0
  %3022 = vmatpush1.bf16.msra.mxu0 %v2999
  %3023 = vmatprep.subr.bf16.mxu0 0
  %3024 = vmatpush2.bf16.msra.mxu0 0
  %3025 = vmatprep.subr.bf16.mxu0 0
  %3026 = vmatpush2.bf16.msra.mxu0 0
  %3027 = vmatprep.subr.bf16.mxu0 0
  %3028 = vmatpush2.bf16.msra.mxu0 0
  %3029 = vmatprep.subr.bf16.mxu0 0
  %3030 = vmatpush2.bf16.msra.mxu0 0
  %3031 = vmatprep.subr.bf16.mxu0 0
  %3032 = vmatpush2.bf16.msra.mxu0 0
  %3033 = vmatprep.subr.bf16.mxu0 0
  %3034 = vmatpush2.bf16.msra.mxu0 0
  %3035 = vmatprep.subr.bf16.mxu0 0
  %3036 = vmatpush2.bf16.msra.mxu0 0
  %3037 = vmatprep.subr.bf16.mxu0 0
  %3038 = vmatpush2.bf16.msra.mxu0 0
  %3039 = vmatprep.mubr.bf16.mxu0 0
  %3040 = vmatmul.mubr.bf16.gmra.mxu0 %v3005
  %v3041 = vpop.f32.mrf.mxu0
  %v3042 = vadd.f32 %v2989, %v3041
  %v3043 = vpop.f32.mrf.mxu0
  %v3044 = vpop.f32.mrf.mxu0
  %v3045 = vadd.f32 %v2989, %v3044
  %v3046 = vpop.f32.mrf.mxu0
  %3047 = vdwg.mxu0
  %v3048 = vxor.u32 %v3042, 2147483648
  %v3049 = vxor.u32 %v3045, 2147483648
  %v3050 = vmul.f32 %v3048, 1.442695
  %v3051 = vpow.pop %v3050
  %v3052 = vmul.f32 %v3049, 1.442695
  %v3053 = vpow.pop %v3052
  %v3054 = vadd.f32 %v3051, 1.0
  %v3055 = vadd.f32 %v3053, 1.0
  %v3056 = vrcp.pop %v3054
  %v3057 = vmul.f32 1.0, %v3056
  %v3058 = vrcp.pop %v3055
  %v3059 = vmul.f32 1.0, %v3058
  %v3060 = vld [vmem:[%s12] sm:$0xf]
  %v3061 = vld [vmem:[%s12 + $0x4] sm:$0xf]
  %v3062 = vld [vmem:[%s12 + $0x8] sm:$0xf]
  %v3063 = vld [vmem:[%s12 + $0xc] sm:$0xf]
  %v3064 = vpack.c.bf16 %v3059, %v3057
  %v3065 = vld [vmem:[%s13] sm:$0x1]
  %v3067 = vlaneseq
  %v3068 = vshrl.u32 %v3067, 7
  %v3069 = vsub.s32 0, %v3068
  %v3070 = vrot.slane %v3065, %v3069
  %v3076 = vunpack.c.l.b16 %v3060
  %v3077 = vunpack.c.l.b16 %v3061
  %v3078 = vunpack.c.l.b16 %v3062
  %v3079 = vunpack.c.l.b16 %v3063
  %v3080 = vpack.c.b16 %v3077, %v3076
  %v3081 = vpack.c.b16 %v3079, %v3078
  %v3085 = vsel %vm3003, %v3064, 0
  %3087 = vmatprep.subr.bf16.mxu0 0
  %3088 = vmatpush1.bf16.msra.mxu0 0
  %3089 = vmatprep.subr.bf16.mxu0 0
  %3090 = vmatpush1.bf16.msra.mxu0 0
  %3091 = vmatprep.subr.bf16.mxu0 0
  %3092 = vmatpush1.bf16.msra.mxu0 0
  %3093 = vmatprep.subr.bf16.mxu0 0
  %3094 = vmatpush1.bf16.msra.mxu0 0
  %3095 = vmatprep.subr.bf16.mxu0 0
  %3096 = vmatpush1.bf16.msra.mxu0 0
  %3097 = vmatprep.subr.bf16.mxu0 0
  %3098 = vmatpush1.bf16.msra.mxu0 0
  %3099 = vmatprep.subr.bf16.mxu0 0
  %3100 = vmatpush1.bf16.msra.mxu0 %v3081
  %3101 = vmatprep.subr.bf16.mxu0 0
  %3102 = vmatpush1.bf16.msra.mxu0 %v3080
  %3103 = vmatprep.subr.bf16.mxu0 0
  %3104 = vmatpush2.bf16.msra.mxu0 0
  %3105 = vmatprep.subr.bf16.mxu0 0
  %3106 = vmatpush2.bf16.msra.mxu0 0
  %3107 = vmatprep.subr.bf16.mxu0 0
  %3108 = vmatpush2.bf16.msra.mxu0 0
  %3109 = vmatprep.subr.bf16.mxu0 0
  %3110 = vmatpush2.bf16.msra.mxu0 0
  %3111 = vmatprep.subr.bf16.mxu0 0
  %3112 = vmatpush2.bf16.msra.mxu0 0
  %3113 = vmatprep.subr.bf16.mxu0 0
  %3114 = vmatpush2.bf16.msra.mxu0 0
  %3115 = vmatprep.subr.bf16.mxu0 0
  %3116 = vmatpush2.bf16.msra.mxu0 0
  %3117 = vmatprep.subr.bf16.mxu0 0
  %3118 = vmatpush2.bf16.msra.mxu0 0
  %3119 = vmatprep.mubr.bf16.mxu0 0
  %3120 = vmatmul.mubr.bf16.gmra.mxu0 %v3085
  %v3121 = vpop.f32.mrf.mxu0
  %v3122 = vadd.f32 %v3070, %v3121
  %v3123 = vpop.f32.mrf.mxu0
  %v3124 = vpop.f32.mrf.mxu0
  %v3125 = vadd.f32 %v3070, %v3124
  %v3126 = vpop.f32.mrf.mxu0
  %3127 = vdwg.mxu0
  %3128 = vst [vmem:[%s14] sm:$0xff] %v3122
  %3129 = vst [vmem:[%s14 + $0x8] sm:$0xff] %v3125
  // Predicated region
  $region58: #{predictor_forward.1} parent=0 // pred_check
    _
  $region59: #{predictor_forward.1} parent=0 // pred_check_branch
    %3131 = sbr.rel (0) target = $region61
  $region60: #{predictor_forward.1} parent=0 // pred_region
    _
  $region61: #{predictor_forward.1} parent=0 // pred_fallthru
    _
  // Predicated region
  $region62: #{predictor_forward.1} parent=0 // pred_check
    _
  $region63: #{predictor_forward.1} parent=0 // pred_check_branch
    %3133 = sbr.rel (0) target = $region65
  $region64: #{predictor_forward.1} parent=0 // pred_region
    _
  $region65: #{predictor_forward.1} parent=0 // pred_fallthru
    _

</llo_original>
